<compile_context>
chip_gen: v6e
topology: v6e:2x2x1
jax: 0.10.0
libtpu: 0.0.40
codegen_flags: <defaults>
</compile_context>

<pallas_src>
import math
from functools import partial

import jax
import jax.numpy as jnp
from jax.experimental import pallas as pl
from jax.experimental.pallas import tpu as pltpu


def _unit_gcn_kernel(x_ref, b_ref, w_ref, *rest,
                     S, O, TV, nb, lane_group, has_down):
    """One grid step = `nb` batch elements.

    x_ref : (C, nb*T*V)   input activations (mxu_dtype), lane index = (n, t, v)
    b_ref : (S, gV, gV)   block-diagonal L2-normalized adjacency (f32)
    w_ref : (S*O, C)      stacked 1x1-conv weights of the S branches
    wd_ref: (O, C)        down-path 1x1-conv weight        (only if has_down)
    p_ref : (O, 4|2)      packed per-channel affine params (f32)
    o_ref : (O, nb*T*V)   output (f32), lane index = (n, t, v)
    """
    if has_down:
        wd_ref, p_ref, o_ref = rest
    else:
        p_ref, o_ref = rest

    eps = 1e-5                                  # InstanceNorm2d default
    cols = nb * TV
    n_grp = cols // lane_group

    x = x_ref[...]                                                   # (C, nb*TV)

    # --- all S branch 1x1 convs at once (biases dropped) --------------------
    z = jnp.dot(w_ref[...], x, preferred_element_type=jnp.float32)  # (S*O, nb*TV) f32

    # --- V-contraction with the adjacency, per aligned 128-lane group -------
    # B[s] is block-diagonal over g = lane_group // V timesteps, so each
    # 128-lane slice of z is contracted correctly even when a group straddles
    # a batch boundary.  z stays f32 (no double rounding), slices are 8-row /
    # 128-lane aligned.
    y_groups = []
    for j in range(n_grp):
        lo = j * lane_group
        yj = jnp.dot(z[0:O, lo:lo + lane_group], b_ref[0],
                     preferred_element_type=jnp.float32)
        for i in range(1, S):
            yj = yj + jnp.dot(z[i * O:(i + 1) * O, lo:lo + lane_group], b_ref[i],
                              preferred_element_type=jnp.float32)
        y_groups.append(yj)
    y = y_groups[0] if n_grp == 1 else jnp.concatenate(y_groups, axis=1)  # (O, nb*TV)

    # --- down path (reuses the already-loaded x tile) ------------------------
    gamma, beta = p_ref[:, 0:1], p_ref[:, 1:2]
    if has_down:
        gamma_d, beta_d = p_ref[:, 2:3], p_ref[:, 3:4]
        d = jnp.dot(wd_ref[...], x, preferred_element_type=jnp.float32)   # (O, nb*TV)
    else:
        # identity residual (C == O); note: rounded to mxu_dtype if the wrapper
        # cast x to bf16 -- use mxu_dtype=float32 if that matters.
        d = x.astype(jnp.float32)

    # --- InstanceNorm (single-pass stats) + residual + ReLU ------------------
    inv = 1.0 / TV
    outs = []
    for n in range(nb):                         # nb is small; slices are
        sl = slice(n * TV, (n + 1) * TV)        # TV-aligned (multiple of 128)
        yn = y[:, sl]
        mu = jnp.sum(yn, axis=1, keepdims=True) * inv
        var = jnp.sum(yn * yn, axis=1, keepdims=True) * inv - mu * mu
        yn = (yn - mu) * jax.lax.rsqrt(var + eps) * gamma + beta

        dn = d[:, sl]
        if has_down:
            dmu = jnp.sum(dn, axis=1, keepdims=True) * inv
            dvar = jnp.sum(dn * dn, axis=1, keepdims=True) * inv - dmu * dmu
            dn = (dn - dmu) * jax.lax.rsqrt(dvar + eps) * gamma_d + beta_d

        outs.append(jnp.maximum(yn + dn, 0.0))
    out = outs[0] if nb == 1 else jnp.concatenate(outs, axis=1)      # (O, nb*TV)
    o_ref[...] = out.astype(o_ref.dtype)


def unit_gcn_forward(x, A, W, Wd=None, gd=None, betad=None, g=None, beta=None,
                     *, nb=1, mxu_dtype=jnp.float32, lane_group=128):
    """Forward pass of unit_gcn (adaptive=True path).

    x : (N, C, T, V)   A : (S, V, V)   W : (S, O, C)
    Wd/gd/betad : down-path params, required iff C != O
    g/beta      : main InstanceNorm affine params, shape (O,)
    nb          : batch elements per grid step (raise on single-TC v5e/v6e;
                  keep N // nb >= 2 on v7x so both TensorCores are fed)
    mxu_dtype   : float32 or bfloat16 (bf16 recommended on v6e/v7x; f32 accum)
    lane_group  : width of one adjacency block-diag group (128 everywhere,
                  256 is slightly better on v6e/v7x)
    """
    N, C, T, V = x.shape
    S, O, _ = W.shape
    TV = T * V
    has_down = (C != O)
    assert g is not None and beta is not None
    assert N % nb == 0, "nb must divide N"
    assert lane_group % V == 0, "pad V so it divides lane_group"   # TODO(synk)
    assert (nb * TV) % lane_group == 0, "nb*T*V must be a multiple of lane_group"
    gsz = lane_group // V

    # --- batch-invariant preprocessing hoisted out of the kernel -------------
    # L2_norm(A): torch.norm(A, 2, dim=1, keepdim=True) + 1e-4
    an = jnp.sqrt(jnp.sum(A * A, axis=1, keepdims=True)) + 1e-4
    An = (A / an).astype(jnp.float32)                                # (S, V, V)
    # Block-diagonal over g timesteps: B[s] = kron(I_g, An[s]), (gV, gV) each.
    eye_g = jnp.eye(gsz, dtype=jnp.float32)
    Bdiag = jnp.einsum('ac,svw->savcw', eye_g, An).reshape(S, lane_group, lane_group)

    # Stacked branch conv weights; x laid out (C, N*T*V) so batch/time/joints
    # all live in the matmul lane dimension.  Casts happen here, not in-kernel.
    Wst = W.reshape(S * O, C).astype(mxu_dtype)
    x_lin = jnp.transpose(x, (1, 0, 2, 3)).reshape(C, N * TV).astype(mxu_dtype)

    if has_down:
        assert Wd is not None and gd is not None and betad is not None
        params = jnp.stack([g, beta, gd, betad], axis=1).astype(jnp.float32)  # (O, 4)
    else:
        params = jnp.stack([g, beta], axis=1).astype(jnp.float32)             # (O, 2)
    P = params.shape[1]

    kernel = partial(_unit_gcn_kernel, S=S, O=O, TV=TV, nb=nb,
                     lane_group=lane_group, has_down=has_down)

    def run(invariant_mode):
        kw = {} if invariant_mode is None else dict(pipeline_mode=invariant_mode)
        in_specs = [
            pl.BlockSpec((C, nb * TV), lambda i: (0, i)),                        # x
            pl.BlockSpec((S, lane_group, lane_group), lambda i: (0, 0, 0), **kw),  # adjacency
            pl.BlockSpec((S * O, C), lambda i: (0, 0), **kw),                    # conv W
        ]
        args = [x_lin, Bdiag, Wst]
        if has_down:
            in_specs.append(pl.BlockSpec((O, C), lambda i: (0, 0), **kw))        # down W
            args.append(Wd.astype(mxu_dtype))
        in_specs.append(pl.BlockSpec((O, P), lambda i: (0, 0), **kw))            # affine
        args.append(params)

        out_lin = pl.pallas_call(
            kernel,
            out_shape=jax.ShapeDtypeStruct((O, N * TV), jnp.float32),
            grid=(N // nb,),
            in_specs=in_specs,
            out_specs=pl.BlockSpec((O, nb * TV), lambda i: (0, i)),
            compiler_params=pltpu.CompilerParams(
                dimension_semantics=("parallel",)),
        )(*args)
        return jax.block_until_ready(out_lin)

    try:
        # Grid-invariant operands: constant index_map means they are not
        # re-fetched, so a single buffer avoids wasting VMEM on the unused
        # second buffer.
        out_lin = run(pl.Buffered(1))
    except Exception:   # pragma: no cover -- JAX build rejecting Buffered(1)
        out_lin = run(None)

    return out_lin.reshape(O, N, T, V).transpose(1, 0, 2, 3)


def _reference(x, A, W, Wd, gd, betad, g, beta):
    """Pure-JAX reference mirroring the PyTorch forward (conv biases = 0)."""
    N, C, T, V = x.shape
    S, O, _ = W.shape
    eps = 1e-5
    an = jnp.sqrt(jnp.sum(A * A, axis=1, keepdims=True)) + 1e-4
    An = A / an
    x2 = x.reshape(N, C * T, V)
    y = jnp.zeros((N, O, T, V), jnp.float32)
    for i in range(S):
        M = jnp.matmul(x2, An[i], precision='highest').reshape(N, C, T, V)
        y = y + jnp.einsum('oc,nctv->notv', W[i], M, precision='highest')

    def inorm(v, gamma, beta_):
        mu = v.mean(axis=(2, 3), keepdims=True)
        var = ((v - mu) ** 2).mean(axis=(2, 3), keepdims=True)
        return ((v - mu) / jnp.sqrt(var + eps) * gamma[None, :, None, None]
                + beta_[None, :, None, None])

    y = inorm(y, g, beta)
    if C != O:
        d = jnp.einsum('oc,nctv->notv', Wd, x, precision='highest')
        d = inorm(d, gd, betad)
    else:
        d = x
    return jnp.maximum(y + d, 0.0)


if __name__ == "__main__":
    # Small shapes consistent with the module: N, C_in, T, V ; C_out ; num_subset
    N, C, T, V = 2, 4, 16, 16
    O, S = 8, 3

    key = jax.random.PRNGKey(0)
    k_x, k_a, k_w, k_wd = jax.random.split(key, 4)

    x = jax.random.normal(k_x, (N, C, T, V), dtype=jnp.float32)

    # Deterministic parameter init mimicking unit_gcn.__init__ (conv biases are
    # zero-initialised and cancelled by InstanceNorm, hence omitted).
    A = jax.random.uniform(k_a, (S, V, V), dtype=jnp.float32)                # PA
    W = jax.random.normal(k_w, (S, O, C), jnp.float32) * math.sqrt(2.0 / O)  # kaiming fan_out
    Wd = jax.random.normal(k_wd, (O, C), jnp.float32) * math.sqrt(2.0 / O)
    gd = jnp.ones((O,), jnp.float32)          # down InstanceNorm weight = 1
    betad = jnp.zeros((O,), jnp.float32)      # down InstanceNorm bias = 0
    g = jnp.full((O,), 1e-6, jnp.float32)     # main InstanceNorm weight = 1e-6
    beta = jnp.zeros((O,), jnp.float32)       # main InstanceNorm bias = 0

    out = unit_gcn_forward(x, A, W, Wd, gd, betad, g, beta,
                           nb=1, mxu_dtype=jnp.float32)
    out = jax.block_until_ready(out)

    ref = jax.block_until_ready(_reference(x, A, W, Wd, gd, betad, g, beta))
    assert out.shape == (N, O, T, V), out.shape
    err = float(jnp.max(jnp.abs(out - ref)))
    if not (err < 5e-3):
        raise AssertionError(f"kernel/reference mismatch, max abs err = {err}")
    print("KERNEL_OK")
</pallas_src>

<mosaic_0001>
module attributes {stable_mosaic.version = 11 : i64} {
  func.func @_unit_gcn_kernel(%arg0: i32, %arg1: memref<4x256xf32, #tpu.memory_space<vmem>>, %arg2: memref<3x128x128xf32, #tpu.memory_space<vmem>>, %arg3: memref<24x4xf32, #tpu.memory_space<vmem>>, %arg4: memref<8x4xf32, #tpu.memory_space<vmem>>, %arg5: memref<8x4xf32, #tpu.memory_space<vmem>>, %arg6: memref<8x256xf32, #tpu.memory_space<vmem>>) attributes {dimension_semantics = [#tpu.dimension_semantics<parallel>], iteration_bounds = array<i64: 2>, scalar_prefetch = 0 : i64, scratch_operands = 0 : i64, tpu.core_type = #tpu.core_type<tc>, window_params = [{transform_indices = @transform_0, window_bounds = array<i64: 4, 256>}, {pipeline_mode = #tpu.pipeline_mode<synchronous>, transform_indices = @transform_1, window_bounds = array<i64: 3, 128, 128>}, {pipeline_mode = #tpu.pipeline_mode<synchronous>, transform_indices = @transform_2, window_bounds = array<i64: 24, 4>}, {pipeline_mode = #tpu.pipeline_mode<synchronous>, transform_indices = @transform_3, window_bounds = array<i64: 8, 4>}, {pipeline_mode = #tpu.pipeline_mode<synchronous>, transform_indices = @transform_4, window_bounds = array<i64: 8, 4>}, {transform_indices = @transform_5, window_bounds = array<i64: 8, 256>}]} {
    %c0 = arith.constant 0 : index
    %c0_0 = arith.constant 0 : index
    %0 = vector.load %arg1[%c0, %c0_0] : memref<4x256xf32, #tpu.memory_space<vmem>>, vector<4x256xf32>
    %c0_1 = arith.constant 0 : index
    %c0_2 = arith.constant 0 : index
    %1 = vector.load %arg3[%c0_1, %c0_2] : memref<24x4xf32, #tpu.memory_space<vmem>>, vector<24x4xf32>
    %cst = arith.constant dense<0.000000e+00> : vector<24x256xf32>
    %2 = tpu.matmul %1, %0, %cst {dimension_numbers = #tpu.dot_dimension_numbers<[1], [0], [0], [1], [0, 0, 1, 1], [], []>} : vector<24x4xf32>, vector<4x256xf32>, vector<24x256xf32> -> vector<24x256xf32>
    %3 = vector.extract_strided_slice %2 {offsets = [0, 0], sizes = [8, 128], strides = [1, 1]} : vector<24x256xf32> to vector<8x128xf32>
    %c0_3 = arith.constant 0 : index
    %c0_4 = arith.constant 0 : index
    %c0_5 = arith.constant 0 : index
    %4 = vector.load %arg2[%c0_3, %c0_4, %c0_5] : memref<3x128x128xf32, #tpu.memory_space<vmem>>, vector<1x128x128xf32>
    %5 = vector.shape_cast %4 : vector<1x128x128xf32> to vector<128x128xf32>
    %cst_6 = arith.constant dense<0.000000e+00> : vector<8x128xf32>
    %6 = tpu.matmul %3, %5, %cst_6 {dimension_numbers = #tpu.dot_dimension_numbers<[1], [0], [0], [1], [0, 0, 1, 1], [], []>} : vector<8x128xf32>, vector<128x128xf32>, vector<8x128xf32> -> vector<8x128xf32>
    %7 = vector.extract_strided_slice %2 {offsets = [8, 0], sizes = [8, 128], strides = [1, 1]} : vector<24x256xf32> to vector<8x128xf32>
    %c1 = arith.constant 1 : index
    %c0_7 = arith.constant 0 : index
    %c0_8 = arith.constant 0 : index
    %8 = vector.load %arg2[%c1, %c0_7, %c0_8] : memref<3x128x128xf32, #tpu.memory_space<vmem>>, vector<1x128x128xf32>
    %9 = vector.shape_cast %8 : vector<1x128x128xf32> to vector<128x128xf32>
    %cst_9 = arith.constant dense<0.000000e+00> : vector<8x128xf32>
    %10 = tpu.matmul %7, %9, %cst_9 {dimension_numbers = #tpu.dot_dimension_numbers<[1], [0], [0], [1], [0, 0, 1, 1], [], []>} : vector<8x128xf32>, vector<128x128xf32>, vector<8x128xf32> -> vector<8x128xf32>
    %11 = arith.addf %6, %10 : vector<8x128xf32>
    %12 = vector.extract_strided_slice %2 {offsets = [16, 0], sizes = [8, 128], strides = [1, 1]} : vector<24x256xf32> to vector<8x128xf32>
    %c2 = arith.constant 2 : index
    %c0_10 = arith.constant 0 : index
    %c0_11 = arith.constant 0 : index
    %13 = vector.load %arg2[%c2, %c0_10, %c0_11] : memref<3x128x128xf32, #tpu.memory_space<vmem>>, vector<1x128x128xf32>
    %14 = vector.shape_cast %13 : vector<1x128x128xf32> to vector<128x128xf32>
    %cst_12 = arith.constant dense<0.000000e+00> : vector<8x128xf32>
    %15 = tpu.matmul %12, %14, %cst_12 {dimension_numbers = #tpu.dot_dimension_numbers<[1], [0], [0], [1], [0, 0, 1, 1], [], []>} : vector<8x128xf32>, vector<128x128xf32>, vector<8x128xf32> -> vector<8x128xf32>
    %16 = arith.addf %11, %15 : vector<8x128xf32>
    %17 = vector.extract_strided_slice %2 {offsets = [0, 128], sizes = [8, 128], strides = [1, 1]} : vector<24x256xf32> to vector<8x128xf32>
    %c0_13 = arith.constant 0 : index
    %c0_14 = arith.constant 0 : index
    %c0_15 = arith.constant 0 : index
    %18 = vector.load %arg2[%c0_13, %c0_14, %c0_15] : memref<3x128x128xf32, #tpu.memory_space<vmem>>, vector<1x128x128xf32>
    %19 = vector.shape_cast %18 : vector<1x128x128xf32> to vector<128x128xf32>
    %cst_16 = arith.constant dense<0.000000e+00> : vector<8x128xf32>
    %20 = tpu.matmul %17, %19, %cst_16 {dimension_numbers = #tpu.dot_dimension_numbers<[1], [0], [0], [1], [0, 0, 1, 1], [], []>} : vector<8x128xf32>, vector<128x128xf32>, vector<8x128xf32> -> vector<8x128xf32>
    %21 = vector.extract_strided_slice %2 {offsets = [8, 128], sizes = [8, 128], strides = [1, 1]} : vector<24x256xf32> to vector<8x128xf32>
    %c1_17 = arith.constant 1 : index
    %c0_18 = arith.constant 0 : index
    %c0_19 = arith.constant 0 : index
    %22 = vector.load %arg2[%c1_17, %c0_18, %c0_19] : memref<3x128x128xf32, #tpu.memory_space<vmem>>, vector<1x128x128xf32>
    %23 = vector.shape_cast %22 : vector<1x128x128xf32> to vector<128x128xf32>
    %cst_20 = arith.constant dense<0.000000e+00> : vector<8x128xf32>
    %24 = tpu.matmul %21, %23, %cst_20 {dimension_numbers = #tpu.dot_dimension_numbers<[1], [0], [0], [1], [0, 0, 1, 1], [], []>} : vector<8x128xf32>, vector<128x128xf32>, vector<8x128xf32> -> vector<8x128xf32>
    %25 = arith.addf %20, %24 : vector<8x128xf32>
    %26 = vector.extract_strided_slice %2 {offsets = [16, 128], sizes = [8, 128], strides = [1, 1]} : vector<24x256xf32> to vector<8x128xf32>
    %c2_21 = arith.constant 2 : index
    %c0_22 = arith.constant 0 : index
    %c0_23 = arith.constant 0 : index
    %27 = vector.load %arg2[%c2_21, %c0_22, %c0_23] : memref<3x128x128xf32, #tpu.memory_space<vmem>>, vector<1x128x128xf32>
    %28 = vector.shape_cast %27 : vector<1x128x128xf32> to vector<128x128xf32>
    %cst_24 = arith.constant dense<0.000000e+00> : vector<8x128xf32>
    %29 = tpu.matmul %26, %28, %cst_24 {dimension_numbers = #tpu.dot_dimension_numbers<[1], [0], [0], [1], [0, 0, 1, 1], [], []>} : vector<8x128xf32>, vector<128x128xf32>, vector<8x128xf32> -> vector<8x128xf32>
    %30 = arith.addf %25, %29 : vector<8x128xf32>
    %31 = tpu.concatenate %16, %30 in 1 : vector<8x128xf32>, vector<8x128xf32> -> vector<8x256xf32>
    %c0_25 = arith.constant 0 : index
    %c0_26 = arith.constant 0 : index
    %32 = vector.load %arg5[%c0_25, %c0_26] : memref<8x4xf32, #tpu.memory_space<vmem>>, vector<8x1xf32>
    %c0_27 = arith.constant 0 : index
    %c1_28 = arith.constant 1 : index
    %33 = vector.load %arg5[%c0_27, %c1_28] : memref<8x4xf32, #tpu.memory_space<vmem>>, vector<8x1xf32>
    %c0_29 = arith.constant 0 : index
    %c2_30 = arith.constant 2 : index
    %34 = vector.load %arg5[%c0_29, %c2_30] : memref<8x4xf32, #tpu.memory_space<vmem>>, vector<8x1xf32>
    %c0_31 = arith.constant 0 : index
    %c3 = arith.constant 3 : index
    %35 = vector.load %arg5[%c0_31, %c3] : memref<8x4xf32, #tpu.memory_space<vmem>>, vector<8x1xf32>
    %c0_32 = arith.constant 0 : index
    %c0_33 = arith.constant 0 : index
    %36 = vector.load %arg4[%c0_32, %c0_33] : memref<8x4xf32, #tpu.memory_space<vmem>>, vector<8x4xf32>
    %cst_34 = arith.constant dense<0.000000e+00> : vector<8x256xf32>
    %37 = tpu.matmul %36, %0, %cst_34 {dimension_numbers = #tpu.dot_dimension_numbers<[1], [0], [0], [1], [0, 0, 1, 1], [], []>} : vector<8x4xf32>, vector<4x256xf32>, vector<8x256xf32> -> vector<8x256xf32>
    %cst_35 = arith.constant dense<0.000000e+00> : vector<8xf32>
    %38 = vector.multi_reduction <add>, %31, %cst_35 [1] : vector<8x256xf32> to vector<8xf32>
    %39 = vector.shape_cast %38 : vector<8xf32> to vector<8x1xf32>
    %cst_36 = arith.constant 3.906250e-03 : f32
    %40 = vector.broadcast %cst_36 : f32 to vector<8x1xf32>
    %41 = arith.mulf %39, %40 : vector<8x1xf32>
    %42 = arith.mulf %31, %31 : vector<8x256xf32>
    %cst_37 = arith.constant dense<0.000000e+00> : vector<8xf32>
    %43 = vector.multi_reduction <add>, %42, %cst_37 [1] : vector<8x256xf32> to vector<8xf32>
    %44 = vector.shape_cast %43 : vector<8xf32> to vector<8x1xf32>
    %cst_38 = arith.constant 3.906250e-03 : f32
    %45 = vector.broadcast %cst_38 : f32 to vector<8x1xf32>
    %46 = arith.mulf %44, %45 : vector<8x1xf32>
    %47 = arith.mulf %41, %41 : vector<8x1xf32>
    %48 = arith.subf %46, %47 : vector<8x1xf32>
    %49 = vector.broadcast %41 : vector<8x1xf32> to vector<8x256xf32>
    %50 = arith.subf %31, %49 : vector<8x256xf32>
    %cst_39 = arith.constant 9.99999974E-6 : f32
    %51 = vector.broadcast %cst_39 : f32 to vector<8x1xf32>
    %52 = arith.addf %48, %51 : vector<8x1xf32>
    %53 = math.rsqrt %52 : vector<8x1xf32>
    %54 = vector.broadcast %53 : vector<8x1xf32> to vector<8x256xf32>
    %55 = arith.mulf %50, %54 : vector<8x256xf32>
    %56 = vector.broadcast %32 : vector<8x1xf32> to vector<8x256xf32>
    %57 = arith.mulf %55, %56 : vector<8x256xf32>
    %58 = vector.broadcast %33 : vector<8x1xf32> to vector<8x256xf32>
    %59 = arith.addf %57, %58 : vector<8x256xf32>
    %cst_40 = arith.constant dense<0.000000e+00> : vector<8xf32>
    %60 = vector.multi_reduction <add>, %37, %cst_40 [1] : vector<8x256xf32> to vector<8xf32>
    %61 = vector.shape_cast %60 : vector<8xf32> to vector<8x1xf32>
    %cst_41 = arith.constant 3.906250e-03 : f32
    %62 = vector.broadcast %cst_41 : f32 to vector<8x1xf32>
    %63 = arith.mulf %61, %62 : vector<8x1xf32>
    %64 = arith.mulf %37, %37 : vector<8x256xf32>
    %cst_42 = arith.constant dense<0.000000e+00> : vector<8xf32>
    %65 = vector.multi_reduction <add>, %64, %cst_42 [1] : vector<8x256xf32> to vector<8xf32>
    %66 = vector.shape_cast %65 : vector<8xf32> to vector<8x1xf32>
    %cst_43 = arith.constant 3.906250e-03 : f32
    %67 = vector.broadcast %cst_43 : f32 to vector<8x1xf32>
    %68 = arith.mulf %66, %67 : vector<8x1xf32>
    %69 = arith.mulf %63, %63 : vector<8x1xf32>
    %70 = arith.subf %68, %69 : vector<8x1xf32>
    %71 = vector.broadcast %63 : vector<8x1xf32> to vector<8x256xf32>
    %72 = arith.subf %37, %71 : vector<8x256xf32>
    %cst_44 = arith.constant 9.99999974E-6 : f32
    %73 = vector.broadcast %cst_44 : f32 to vector<8x1xf32>
    %74 = arith.addf %70, %73 : vector<8x1xf32>
    %75 = math.rsqrt %74 : vector<8x1xf32>
    %76 = vector.broadcast %75 : vector<8x1xf32> to vector<8x256xf32>
    %77 = arith.mulf %72, %76 : vector<8x256xf32>
    %78 = vector.broadcast %34 : vector<8x1xf32> to vector<8x256xf32>
    %79 = arith.mulf %77, %78 : vector<8x256xf32>
    %80 = vector.broadcast %35 : vector<8x1xf32> to vector<8x256xf32>
    %81 = arith.addf %79, %80 : vector<8x256xf32>
    %82 = arith.addf %59, %81 : vector<8x256xf32>
    %cst_45 = arith.constant 0.000000e+00 : f32
    %83 = vector.broadcast %cst_45 : f32 to vector<8x256xf32>
    %84 = arith.maximumf %82, %83 : vector<8x256xf32>
    %c0_46 = arith.constant 0 : index
    %c0_47 = arith.constant 0 : index
    %85 = vector.load %arg6[%c0_46, %c0_47] : memref<8x256xf32, #tpu.memory_space<vmem>>, vector<8x256xf32>
    tpu.vector_store %arg6[%c0_46, %c0_47], %84 {strides = array<i32>} : memref<8x256xf32, #tpu.memory_space<vmem>>, vector<8x256xf32>,
    return
  }
  func.func @transform_0(%arg0: i32) -> (i32, i32) {
    %c0_i32 = arith.constant 0 : i32
    %c0_i32_0 = arith.constant 0 : i32
    return %c0_i32, %arg0 : i32, i32
  }
  func.func @transform_1(%arg0: i32) -> (i32, i32, i32) {
    %c0_i32 = arith.constant 0 : i32
    %c0_i32_0 = arith.constant 0 : i32
    %c0_i32_1 = arith.constant 0 : i32
    %c0_i32_2 = arith.constant 0 : i32
    return %c0_i32, %c0_i32_0, %c0_i32_1 : i32, i32, i32
  }
  func.func @transform_2(%arg0: i32) -> (i32, i32) {
    %c0_i32 = arith.constant 0 : i32
    %c0_i32_0 = arith.constant 0 : i32
    %c0_i32_1 = arith.constant 0 : i32
    return %c0_i32, %c0_i32_0 : i32, i32
  }
  func.func @transform_3(%arg0: i32) -> (i32, i32) {
    %c0_i32 = arith.constant 0 : i32
    %c0_i32_0 = arith.constant 0 : i32
    %c0_i32_1 = arith.constant 0 : i32
    return %c0_i32, %c0_i32_0 : i32, i32
  }
  func.func @transform_4(%arg0: i32) -> (i32, i32) {
    %c0_i32 = arith.constant 0 : i32
    %c0_i32_0 = arith.constant 0 : i32
    %c0_i32_1 = arith.constant 0 : i32
    return %c0_i32, %c0_i32_0 : i32, i32
  }
  func.func @transform_5(%arg0: i32) -> (i32, i32) {
    %c0_i32 = arith.constant 0 : i32
    %c0_i32_0 = arith.constant 0 : i32
    return %c0_i32, %arg0 : i32, i32
  }
}

module attributes {stable_mosaic.version = 11 : i64} {
  func.func @_unit_gcn_kernel(%arg0: i32, %arg1: memref<4x256xf32, #tpu.memory_space<vmem>>, %arg2: memref<3x128x128xf32, #tpu.memory_space<vmem>>, %arg3: memref<24x4xf32, #tpu.memory_space<vmem>>, %arg4: memref<8x4xf32, #tpu.memory_space<vmem>>, %arg5: memref<8x4xf32, #tpu.memory_space<vmem>>, %arg6: memref<8x256xf32, #tpu.memory_space<vmem>>) attributes {dimension_semantics = [#tpu.dimension_semantics<parallel>], iteration_bounds = array<i64: 2>, scalar_prefetch = 0 : i64, scratch_operands = 0 : i64, tpu.core_type = #tpu.core_type<tc>, window_params = [{transform_indices = @transform_0, window_bounds = array<i64: 4, 256>}, {pipeline_mode = #tpu.pipeline_mode<synchronous>, transform_indices = @transform_1, window_bounds = array<i64: 3, 128, 128>}, {pipeline_mode = #tpu.pipeline_mode<synchronous>, transform_indices = @transform_2, window_bounds = array<i64: 24, 4>}, {pipeline_mode = #tpu.pipeline_mode<synchronous>, transform_indices = @transform_3, window_bounds = array<i64: 8, 4>}, {pipeline_mode = #tpu.pipeline_mode<synchronous>, transform_indices = @transform_4, window_bounds = array<i64: 8, 4>}, {transform_indices = @transform_5, window_bounds = array<i64: 8, 256>}]} {
    %c0 = arith.constant 0 : index
    %c0_0 = arith.constant 0 : index
    %0 = vector.load %arg1[%c0, %c0_0] : memref<4x256xf32, #tpu.memory_space<vmem>>, vector<4x256xf32>
    %c0_1 = arith.constant 0 : index
    %c0_2 = arith.constant 0 : index
    %1 = vector.load %arg3[%c0_1, %c0_2] : memref<24x4xf32, #tpu.memory_space<vmem>>, vector<24x4xf32>
    %cst = arith.constant dense<0.000000e+00> : vector<24x256xf32>
    %2 = tpu.matmul %1, %0, %cst {dimension_numbers = #tpu.dot_dimension_numbers<[1], [0], [0], [1], [0, 0, 1, 1], [], []>} : vector<24x4xf32>, vector<4x256xf32>, vector<24x256xf32> -> vector<24x256xf32>
    %3 = vector.extract_strided_slice %2 {offsets = [0, 0], sizes = [8, 128], strides = [1, 1]} : vector<24x256xf32> to vector<8x128xf32>
    %c0_3 = arith.constant 0 : index
    %c0_4 = arith.constant 0 : index
    %c0_5 = arith.constant 0 : index
    %4 = vector.load %arg2[%c0_3, %c0_4, %c0_5] : memref<3x128x128xf32, #tpu.memory_space<vmem>>, vector<1x128x128xf32>
    %5 = vector.shape_cast %4 : vector<1x128x128xf32> to vector<128x128xf32>
    %cst_6 = arith.constant dense<0.000000e+00> : vector<8x128xf32>
    %6 = tpu.matmul %3, %5, %cst_6 {dimension_numbers = #tpu.dot_dimension_numbers<[1], [0], [0], [1], [0, 0, 1, 1], [], []>} : vector<8x128xf32>, vector<128x128xf32>, vector<8x128xf32> -> vector<8x128xf32>
    %7 = vector.extract_strided_slice %2 {offsets = [8, 0], sizes = [8, 128], strides = [1, 1]} : vector<24x256xf32> to vector<8x128xf32>
    %c1 = arith.constant 1 : index
    %c0_7 = arith.constant 0 : index
    %c0_8 = arith.constant 0 : index
    %8 = vector.load %arg2[%c1, %c0_7, %c0_8] : memref<3x128x128xf32, #tpu.memory_space<vmem>>, vector<1x128x128xf32>
    %9 = vector.shape_cast %8 : vector<1x128x128xf32> to vector<128x128xf32>
    %cst_9 = arith.constant dense<0.000000e+00> : vector<8x128xf32>
    %10 = tpu.matmul %7, %9, %cst_9 {dimension_numbers = #tpu.dot_dimension_numbers<[1], [0], [0], [1], [0, 0, 1, 1], [], []>} : vector<8x128xf32>, vector<128x128xf32>, vector<8x128xf32> -> vector<8x128xf32>
    %11 = arith.addf %6, %10 : vector<8x128xf32>
    %12 = vector.extract_strided_slice %2 {offsets = [16, 0], sizes = [8, 128], strides = [1, 1]} : vector<24x256xf32> to vector<8x128xf32>
    %c2 = arith.constant 2 : index
    %c0_10 = arith.constant 0 : index
    %c0_11 = arith.constant 0 : index
    %13 = vector.load %arg2[%c2, %c0_10, %c0_11] : memref<3x128x128xf32, #tpu.memory_space<vmem>>, vector<1x128x128xf32>
    %14 = vector.shape_cast %13 : vector<1x128x128xf32> to vector<128x128xf32>
    %cst_12 = arith.constant dense<0.000000e+00> : vector<8x128xf32>
    %15 = tpu.matmul %12, %14, %cst_12 {dimension_numbers = #tpu.dot_dimension_numbers<[1], [0], [0], [1], [0, 0, 1, 1], [], []>} : vector<8x128xf32>, vector<128x128xf32>, vector<8x128xf32> -> vector<8x128xf32>
    %16 = arith.addf %11, %15 : vector<8x128xf32>
    %17 = vector.extract_strided_slice %2 {offsets = [0, 128], sizes = [8, 128], strides = [1, 1]} : vector<24x256xf32> to vector<8x128xf32>
    %c0_13 = arith.constant 0 : index
    %c0_14 = arith.constant 0 : index
    %c0_15 = arith.constant 0 : index
    %18 = vector.load %arg2[%c0_13, %c0_14, %c0_15] : memref<3x128x128xf32, #tpu.memory_space<vmem>>, vector<1x128x128xf32>
    %19 = vector.shape_cast %18 : vector<1x128x128xf32> to vector<128x128xf32>
    %cst_16 = arith.constant dense<0.000000e+00> : vector<8x128xf32>
    %20 = tpu.matmul %17, %19, %cst_16 {dimension_numbers = #tpu.dot_dimension_numbers<[1], [0], [0], [1], [0, 0, 1, 1], [], []>} : vector<8x128xf32>, vector<128x128xf32>, vector<8x128xf32> -> vector<8x128xf32>
    %21 = vector.extract_strided_slice %2 {offsets = [8, 128], sizes = [8, 128], strides = [1, 1]} : vector<24x256xf32> to vector<8x128xf32>
    %c1_17 = arith.constant 1 : index
    %c0_18 = arith.constant 0 : index
    %c0_19 = arith.constant 0 : index
    %22 = vector.load %arg2[%c1_17, %c0_18, %c0_19] : memref<3x128x128xf32, #tpu.memory_space<vmem>>, vector<1x128x128xf32>
    %23 = vector.shape_cast %22 : vector<1x128x128xf32> to vector<128x128xf32>
    %cst_20 = arith.constant dense<0.000000e+00> : vector<8x128xf32>
    %24 = tpu.matmul %21, %23, %cst_20 {dimension_numbers = #tpu.dot_dimension_numbers<[1], [0], [0], [1], [0, 0, 1, 1], [], []>} : vector<8x128xf32>, vector<128x128xf32>, vector<8x128xf32> -> vector<8x128xf32>
    %25 = arith.addf %20, %24 : vector<8x128xf32>
    %26 = vector.extract_strided_slice %2 {offsets = [16, 128], sizes = [8, 128], strides = [1, 1]} : vector<24x256xf32> to vector<8x128xf32>
    %c2_21 = arith.constant 2 : index
    %c0_22 = arith.constant 0 : index
    %c0_23 = arith.constant 0 : index
    %27 = vector.load %arg2[%c2_21, %c0_22, %c0_23] : memref<3x128x128xf32, #tpu.memory_space<vmem>>, vector<1x128x128xf32>
    %28 = vector.shape_cast %27 : vector<1x128x128xf32> to vector<128x128xf32>
    %cst_24 = arith.constant dense<0.000000e+00> : vector<8x128xf32>
    %29 = tpu.matmul %26, %28, %cst_24 {dimension_numbers = #tpu.dot_dimension_numbers<[1], [0], [0], [1], [0, 0, 1, 1], [], []>} : vector<8x128xf32>, vector<128x128xf32>, vector<8x128xf32> -> vector<8x128xf32>
    %30 = arith.addf %25, %29 : vector<8x128xf32>
    %31 = tpu.concatenate %16, %30 in 1 : vector<8x128xf32>, vector<8x128xf32> -> vector<8x256xf32>
    %c0_25 = arith.constant 0 : index
    %c0_26 = arith.constant 0 : index
    %32 = vector.load %arg5[%c0_25, %c0_26] : memref<8x4xf32, #tpu.memory_space<vmem>>, vector<8x1xf32>
    %c0_27 = arith.constant 0 : index
    %c1_28 = arith.constant 1 : index
    %33 = vector.load %arg5[%c0_27, %c1_28] : memref<8x4xf32, #tpu.memory_space<vmem>>, vector<8x1xf32>
    %c0_29 = arith.constant 0 : index
    %c2_30 = arith.constant 2 : index
    %34 = vector.load %arg5[%c0_29, %c2_30] : memref<8x4xf32, #tpu.memory_space<vmem>>, vector<8x1xf32>
    %c0_31 = arith.constant 0 : index
    %c3 = arith.constant 3 : index
    %35 = vector.load %arg5[%c0_31, %c3] : memref<8x4xf32, #tpu.memory_space<vmem>>, vector<8x1xf32>
    %c0_32 = arith.constant 0 : index
    %c0_33 = arith.constant 0 : index
    %36 = vector.load %arg4[%c0_32, %c0_33] : memref<8x4xf32, #tpu.memory_space<vmem>>, vector<8x4xf32>
    %cst_34 = arith.constant dense<0.000000e+00> : vector<8x256xf32>
    %37 = tpu.matmul %36, %0, %cst_34 {dimension_numbers = #tpu.dot_dimension_numbers<[1], [0], [0], [1], [0, 0, 1, 1], [], []>} : vector<8x4xf32>, vector<4x256xf32>, vector<8x256xf32> -> vector<8x256xf32>
    %cst_35 = arith.constant dense<0.000000e+00> : vector<8xf32>
    %38 = vector.multi_reduction <add>, %31, %cst_35 [1] : vector<8x256xf32> to vector<8xf32>
    %39 = vector.shape_cast %38 : vector<8xf32> to vector<8x1xf32>
    %cst_36 = arith.constant 3.906250e-03 : f32
    %40 = vector.broadcast %cst_36 : f32 to vector<8x1xf32>
    %41 = arith.mulf %39, %40 : vector<8x1xf32>
    %42 = arith.mulf %31, %31 : vector<8x256xf32>
    %cst_37 = arith.constant dense<0.000000e+00> : vector<8xf32>
    %43 = vector.multi_reduction <add>, %42, %cst_37 [1] : vector<8x256xf32> to vector<8xf32>
    %44 = vector.shape_cast %43 : vector<8xf32> to vector<8x1xf32>
    %cst_38 = arith.constant 3.906250e-03 : f32
    %45 = vector.broadcast %cst_38 : f32 to vector<8x1xf32>
    %46 = arith.mulf %44, %45 : vector<8x1xf32>
    %47 = arith.mulf %41, %41 : vector<8x1xf32>
    %48 = arith.subf %46, %47 : vector<8x1xf32>
    %49 = vector.broadcast %41 : vector<8x1xf32> to vector<8x256xf32>
    %50 = arith.subf %31, %49 : vector<8x256xf32>
    %cst_39 = arith.constant 9.99999974E-6 : f32
    %51 = vector.broadcast %cst_39 : f32 to vector<8x1xf32>
    %52 = arith.addf %48, %51 : vector<8x1xf32>
    %53 = math.rsqrt %52 : vector<8x1xf32>
    %54 = vector.broadcast %53 : vector<8x1xf32> to vector<8x256xf32>
    %55 = arith.mulf %50, %54 : vector<8x256xf32>
    %56 = vector.broadcast %32 : vector<8x1xf32> to vector<8x256xf32>
    %57 = arith.mulf %55, %56 : vector<8x256xf32>
    %58 = vector.broadcast %33 : vector<8x1xf32> to vector<8x256xf32>
    %59 = arith.addf %57, %58 : vector<8x256xf32>
    %cst_40 = arith.constant dense<0.000000e+00> : vector<8xf32>
    %60 = vector.multi_reduction <add>, %37, %cst_40 [1] : vector<8x256xf32> to vector<8xf32>
    %61 = vector.shape_cast %60 : vector<8xf32> to vector<8x1xf32>
    %cst_41 = arith.constant 3.906250e-03 : f32
    %62 = vector.broadcast %cst_41 : f32 to vector<8x1xf32>
    %63 = arith.mulf %61, %62 : vector<8x1xf32>
    %64 = arith.mulf %37, %37 : vector<8x256xf32>
    %cst_42 = arith.constant dense<0.000000e+00> : vector<8xf32>
    %65 = vector.multi_reduction <add>, %64, %cst_42 [1] : vector<8x256xf32> to vector<8xf32>
    %66 = vector.shape_cast %65 : vector<8xf32> to vector<8x1xf32>
    %cst_43 = arith.constant 3.906250e-03 : f32
    %67 = vector.broadcast %cst_43 : f32 to vector<8x1xf32>
    %68 = arith.mulf %66, %67 : vector<8x1xf32>
    %69 = arith.mulf %63, %63 : vector<8x1xf32>
    %70 = arith.subf %68, %69 : vector<8x1xf32>
    %71 = vector.broadcast %63 : vector<8x1xf32> to vector<8x256xf32>
    %72 = arith.subf %37, %71 : vector<8x256xf32>
    %cst_44 = arith.constant 9.99999974E-6 : f32
    %73 = vector.broadcast %cst_44 : f32 to vector<8x1xf32>
    %74 = arith.addf %70, %73 : vector<8x1xf32>
    %75 = math.rsqrt %74 : vector<8x1xf32>
    %76 = vector.broadcast %75 : vector<8x1xf32> to vector<8x256xf32>
    %77 = arith.mulf %72, %76 : vector<8x256xf32>
    %78 = vector.broadcast %34 : vector<8x1xf32> to vector<8x256xf32>
    %79 = arith.mulf %77, %78 : vector<8x256xf32>
    %80 = vector.broadcast %35 : vector<8x1xf32> to vector<8x256xf32>
    %81 = arith.addf %79, %80 : vector<8x256xf32>
    %82 = arith.addf %59, %81 : vector<8x256xf32>
    %cst_45 = arith.constant 0.000000e+00 : f32
    %83 = vector.broadcast %cst_45 : f32 to vector<8x256xf32>
    %84 = arith.maximumf %82, %83 : vector<8x256xf32>
    %c0_46 = arith.constant 0 : index
    %c0_47 = arith.constant 0 : index
    %85 = vector.load %arg6[%c0_46, %c0_47] : memref<8x256xf32, #tpu.memory_space<vmem>>, vector<8x256xf32>
    tpu.vector_store %arg6[%c0_46, %c0_47], %84 {strides = array<i32>} : memref<8x256xf32, #tpu.memory_space<vmem>>, vector<8x256xf32>,
    return
  }
  func.func @transform_0(%arg0: i32) -> (i32, i32) {
    %c0_i32 = arith.constant 0 : i32
    %c0_i32_0 = arith.constant 0 : i32
    return %c0_i32, %arg0 : i32, i32
  }
  func.func @transform_1(%arg0: i32) -> (i32, i32, i32) {
    %c0_i32 = arith.constant 0 : i32
    %c0_i32_0 = arith.constant 0 : i32
    %c0_i32_1 = arith.constant 0 : i32
    %c0_i32_2 = arith.constant 0 : i32
    return %c0_i32, %c0_i32_0, %c0_i32_1 : i32, i32, i32
  }
  func.func @transform_2(%arg0: i32) -> (i32, i32) {
    %c0_i32 = arith.constant 0 : i32
    %c0_i32_0 = arith.constant 0 : i32
    %c0_i32_1 = arith.constant 0 : i32
    return %c0_i32, %c0_i32_0 : i32, i32
  }
  func.func @transform_3(%arg0: i32) -> (i32, i32) {
    %c0_i32 = arith.constant 0 : i32
    %c0_i32_0 = arith.constant 0 : i32
    %c0_i32_1 = arith.constant 0 : i32
    return %c0_i32, %c0_i32_0 : i32, i32
  }
  func.func @transform_4(%arg0: i32) -> (i32, i32) {
    %c0_i32 = arith.constant 0 : i32
    %c0_i32_0 = arith.constant 0 : i32
    %c0_i32_1 = arith.constant 0 : i32
    return %c0_i32, %c0_i32_0 : i32, i32
  }
  func.func @transform_5(%arg0: i32) -> (i32, i32) {
    %c0_i32 = arith.constant 0 : i32
    %c0_i32_0 = arith.constant 0 : i32
    return %c0_i32, %arg0 : i32, i32
  }
}

</mosaic_0001>

<llo_original>
// kernel: tpu_custom_call.1
$region0: #{tpu_custom_call.1}
  #allocation0 [shape = 'u32[]', space=smem, size = 0x4, offset = 0x4, fixed_abs, tag = 'smem constant byte address 0x4 - core index']
  #allocation1 [shape = 'u32[144,128]{1,0:T(1,128)}', space=vmem, size = 0x12000, scoped, tag = 'internal scratch']
  %s0 = inlined_call_operand.vmem [shape: f32[4,512], index: 0, kind: input, shape index: {}]
  %s1 = inlined_call_operand.hbm [shape: f32[3,128,128], index: 1, kind: input, shape index: {}]
  %s2 = inlined_call_operand.vmem [shape: f32[24,4], index: 2, kind: input, shape index: {}]
  %s3 = inlined_call_operand.vmem [shape: f32[8,4], index: 3, kind: input, shape index: {}]
  %s4 = inlined_call_operand.vmem [shape: f32[8,4], index: 4, kind: input, shape index: {}]
  %s5 = inlined_call_operand.hbm [shape: f32[8,512], index: 5, kind: output, shape index: {}]
  %s6 = sld [smem:[#allocation0]]
  $region57: #{tpu_custom_call.1} parent=0
    _
  %s8 = ssub.s32 1, %s6
  %s9 = scalar_select 0, %s8, %s6
  $region1: #{tpu_custom_call.1} parent=0
    #allocation2 [shape = 'u8[196608]{0}', space=vmem, size = 0x30000, scoped, tag = 'input window, operand 1, single buffered']
    #allocation3 [shape = 's32[2]{0}', space=sflag, size = 0x8, scoped, tag = 'scoped memory for tpu_custom_call.1']
    #allocation4 [shape = 's32[2]{0}', space=sflag, size = 0x8, scoped, tag = 'scoped memory for tpu_custom_call.1']
    #allocation5 [shape = 'u8[16384]{0}', space=vmem, size = 0x4000, scoped, tag = 'output window, operand 0']
    %10 = vsyncpa [#allocation3], 0
    %11 = vsyncpa [#allocation4], 0
    %s12 = scalar_lea.sflag [#allocation4], 1
    %13 = vsyncpa %s12, 0
    loop: start=0, step=1, limit=4
    $region2: #{tpu_custom_call.1} parent=1 // loop_pre_header
      _
    $region3: #{tpu_custom_call.1} parent=1 // loop_header
      %s15 = sphi 0, %s19
      %p16 = scmp.ge.s32.totalorder %s15, 4
      %s25 = sphi 0, %s27
      %s28 = sphi 0, %s25
      %s29 = sphi 0, %s28
      %s45 = sphi 0, %s29
      %s49 = sphi 0, %s49
      %s51 = sphi 0, %s49
      %s52 = sphi 0, %s51
      %s66 = sphi 0, %s52
      %s70 = sphi 0, %s70
      %s72 = sphi 0, %s70
      %s73 = sphi 0, %s72
      %s87 = sphi 0, %s73
      %s91 = sphi 0, %s91
      %s93 = sphi 0, %s91
      %s94 = sphi 0, %s93
      %s108 = sphi 0, %s94
      %s112 = sphi 0, %s112
      %s114 = sphi 0, %s112
      %s115 = sphi 0, %s114
      %s129 = sphi 0, %s115
      %s135 = sphi 0, %s137
      %s138 = sphi 0, %s135
      %s139 = sphi 0, %s138
      %s155 = sphi 0, %s139
    $region4: #{tpu_custom_call.1} parent=1 // loop_header_branch
      %18 = sbr.rel (%p16) target = $region8
    $region5: #{tpu_custom_call.1} parent=1 // loop_body
      %s20 = ssub.s32 %s15, 1
      %s21 = ssub.s32 %s15, 2
      %s22 = sadd.s32 %s15, 1
      %s23 = ssub.s32 %s15, %s22
      %p24 = scmp.eq.s32.totalorder %s23, 0
      %s26 = sadd.s32 %s25, 1
      %s27 = scalar_select %p24, %s25, %s26
      %p30 = pneg %p24
      %p31 = scmp.eq.s32.totalorder %s15, 1
      %p32 = por %p30, %p31
      %p33 = scmp.ne.s32.totalorder %s25, %s28
      %p34 = scmp.eq.s32.totalorder %s15, 0
      %p35 = por %p33, %p34
      %p36 = scmp.ne.s32.totalorder %s25, %s28
      %p37 = scmp.eq.s32.totalorder %s20, 1
      %p38 = por %p36, %p37
      %p39 = scmp.ne.s32.totalorder %s28, %s29
      %p40 = scmp.eq.s32.totalorder %s20, 0
      %p41 = por %p39, %p40
      %p42 = scmp.ne.s32.totalorder %s28, %s29
      %p43 = scmp.eq.s32.totalorder %s21, 1
      %p44 = por %p42, %p43
      %p46 = scmp.ne.s32.totalorder %s29, %s45
      %p47 = scmp.eq.s32.totalorder %s21, 0
      %p48 = por %p46, %p47
      %s50 = sadd.s32 %s49, 1
      %p53 = scmp.eq.s32.totalorder %s15, 1
      %p54 = scmp.ne.s32.totalorder %s49, %s51
      %p55 = scmp.eq.s32.totalorder %s15, 0
      %p56 = por %p54, %p55
      %p57 = scmp.ne.s32.totalorder %s49, %s51
      %p58 = scmp.eq.s32.totalorder %s20, 1
      %p59 = por %p57, %p58
      %p60 = scmp.ne.s32.totalorder %s51, %s52
      %p61 = scmp.eq.s32.totalorder %s20, 0
      %p62 = por %p60, %p61
      %p63 = scmp.ne.s32.totalorder %s51, %s52
      %p64 = scmp.eq.s32.totalorder %s21, 1
      %p65 = por %p63, %p64
      %p67 = scmp.ne.s32.totalorder %s52, %s66
      %p68 = scmp.eq.s32.totalorder %s21, 0
      %p69 = por %p67, %p68
      %s71 = sadd.s32 %s70, 1
      %p74 = scmp.eq.s32.totalorder %s15, 1
      %p75 = scmp.ne.s32.totalorder %s70, %s72
      %p76 = scmp.eq.s32.totalorder %s15, 0
      %p77 = por %p75, %p76
      %p78 = scmp.ne.s32.totalorder %s70, %s72
      %p79 = scmp.eq.s32.totalorder %s20, 1
      %p80 = por %p78, %p79
      %p81 = scmp.ne.s32.totalorder %s72, %s73
      %p82 = scmp.eq.s32.totalorder %s20, 0
      %p83 = por %p81, %p82
      %p84 = scmp.ne.s32.totalorder %s72, %s73
      %p85 = scmp.eq.s32.totalorder %s21, 1
      %p86 = por %p84, %p85
      %p88 = scmp.ne.s32.totalorder %s73, %s87
      %p89 = scmp.eq.s32.totalorder %s21, 0
      %p90 = por %p88, %p89
      %s92 = sadd.s32 %s91, 1
      %p95 = scmp.eq.s32.totalorder %s15, 1
      %p96 = scmp.ne.s32.totalorder %s91, %s93
      %p97 = scmp.eq.s32.totalorder %s15, 0
      %p98 = por %p96, %p97
      %p99 = scmp.ne.s32.totalorder %s91, %s93
      %p100 = scmp.eq.s32.totalorder %s20, 1
      %p101 = por %p99, %p100
      %p102 = scmp.ne.s32.totalorder %s93, %s94
      %p103 = scmp.eq.s32.totalorder %s20, 0
      %p104 = por %p102, %p103
      %p105 = scmp.ne.s32.totalorder %s93, %s94
      %p106 = scmp.eq.s32.totalorder %s21, 1
      %p107 = por %p105, %p106
      %p109 = scmp.ne.s32.totalorder %s94, %s108
      %p110 = scmp.eq.s32.totalorder %s21, 0
      %p111 = por %p109, %p110
      %s113 = sadd.s32 %s112, 1
      %p116 = scmp.eq.s32.totalorder %s15, 1
      %p117 = scmp.ne.s32.totalorder %s112, %s114
      %p118 = scmp.eq.s32.totalorder %s15, 0
      %p119 = por %p117, %p118
      %p120 = scmp.ne.s32.totalorder %s112, %s114
      %p121 = scmp.eq.s32.totalorder %s20, 1
      %p122 = por %p120, %p121
      %p123 = scmp.ne.s32.totalorder %s114, %s115
      %p124 = scmp.eq.s32.totalorder %s20, 0
      %p125 = por %p123, %p124
      %p126 = scmp.ne.s32.totalorder %s114, %s115
      %p127 = scmp.eq.s32.totalorder %s21, 1
      %p128 = por %p126, %p127
      %p130 = scmp.ne.s32.totalorder %s115, %s129
      %p131 = scmp.eq.s32.totalorder %s21, 0
      %p132 = por %p130, %p131
      %s133 = ssub.s32 %s15, %s22
      %p134 = scmp.eq.s32.totalorder %s133, 0
      %s136 = sadd.s32 %s135, 1
      %s137 = scalar_select %p134, %s135, %s136
      %p140 = pneg %p134
      %p141 = scmp.eq.s32.totalorder %s15, 1
      %p142 = por %p140, %p141
      %p143 = scmp.ne.s32.totalorder %s135, %s138
      %p144 = scmp.eq.s32.totalorder %s15, 0
      %p145 = por %p143, %p144
      %p146 = scmp.ne.s32.totalorder %s135, %s138
      %p147 = scmp.eq.s32.totalorder %s20, 1
      %p148 = por %p146, %p147
      %p149 = scmp.ne.s32.totalorder %s138, %s139
      %p150 = scmp.eq.s32.totalorder %s20, 0
      %p151 = por %p149, %p150
      %p152 = scmp.ne.s32.totalorder %s138, %s139
      %p153 = scmp.eq.s32.totalorder %s21, 1
      %p154 = por %p152, %p153
      %p156 = scmp.ne.s32.totalorder %s139, %s155
      %p157 = scmp.eq.s32.totalorder %s21, 0
      %p158 = por %p156, %p157
      %p159 = scmp.le.s32.totalorder 1, %s15
      %p160 = scmp.lt.s32.totalorder %s15, 3
      %p161 = pnand %p159, %p160
      %p162 = pneg %p161
      // Predicated region
      $region9: #{tpu_custom_call.1} parent=5 // pred_check
        _
      $region10: #{tpu_custom_call.1} parent=5 // pred_check_branch
        %164 = sbr.rel (%p161) target = $region12
      $region11: #{tpu_custom_call.1} parent=5 // pred_region
        %s165 = ssub.s32 %s15, 1
        // Predicated region
        $region13: #{tpu_custom_call.1} parent=11 // pred_check
          %p166 = pneg %p62
        $region14: #{tpu_custom_call.1} parent=11 // pred_check_branch
          %168 = sbr.rel (%p166) target = $region16
        $region15: #{tpu_custom_call.1} parent=11 // pred_region
          %s170 = ssub.s32 6144, 6144
          %171 = vsyncadd [#allocation3], %s170
          %s172 = sshll.u32 [#allocation2], 4
          %s173 = int_to_ptr.vmem [resolvable:$true] %s172
          %178 = dma.hbm_to_vmem [thread:$0]  %s1, 6144, %s173, [#allocation3], 128, 128, 8
        $region16: #{tpu_custom_call.1} parent=11 // pred_fallthru
          _
        // Predicated region
        $region17: #{tpu_custom_call.1} parent=11 // pred_check
          %p179 = pneg %p83
        $region18: #{tpu_custom_call.1} parent=11 // pred_check_branch
          %181 = sbr.rel (%p179) target = $region20
        $region19: #{tpu_custom_call.1} parent=11 // pred_region
          _
        $region20: #{tpu_custom_call.1} parent=11 // pred_fallthru
          _
        // Predicated region
        $region21: #{tpu_custom_call.1} parent=11 // pred_check
          %p182 = pneg %p104
        $region22: #{tpu_custom_call.1} parent=11 // pred_check_branch
          %184 = sbr.rel (%p182) target = $region24
        $region23: #{tpu_custom_call.1} parent=11 // pred_region
          _
        $region24: #{tpu_custom_call.1} parent=11 // pred_fallthru
          _
        // Predicated region
        $region25: #{tpu_custom_call.1} parent=11 // pred_check
          %p185 = pneg %p125
        $region26: #{tpu_custom_call.1} parent=11 // pred_check_branch
          %187 = sbr.rel (%p185) target = $region28
        $region27: #{tpu_custom_call.1} parent=11 // pred_region
          _
        $region28: #{tpu_custom_call.1} parent=11 // pred_fallthru
          _
      $region12: #{tpu_custom_call.1} parent=5 // pred_fallthru
        _
      %p188 = scmp.lt.s32.totalorder %s15, 2
      // Predicated region
      $region29: #{tpu_custom_call.1} parent=5 // pred_check
        %p189 = pneg %p188
      $region30: #{tpu_custom_call.1} parent=5 // pred_check_branch
        %191 = sbr.rel (%p189) target = $region32
      $region31: #{tpu_custom_call.1} parent=5 // pred_region
        // Predicated region
        $region33: #{tpu_custom_call.1} parent=31 // pred_check
          %p192 = pneg %p35
        $region34: #{tpu_custom_call.1} parent=31 // pred_check_branch
          %194 = sbr.rel (%p192) target = $region36
        $region35: #{tpu_custom_call.1} parent=31 // pred_region
          %s195 = smul.u32 2, %s15
          %p196 = scmp.lt.s32.totalorder %s195, 3
          %s197 = scalar_select %p196, %s195, 3
          %s198 = smul.addr %s197, 4
          %s199 = scalar_lea.vmem %s0, %s198
          %s200 = smul.u32 2, %s15
        $region36: #{tpu_custom_call.1} parent=31 // pred_fallthru
          _
      $region32: #{tpu_custom_call.1} parent=5 // pred_fallthru
        _
      %p201 = scmp.le.s32.totalorder 1, %s15
      %p202 = scmp.lt.s32.totalorder %s15, 3
      %p203 = pnand %p201, %p202
      %p204 = pneg %p203
      // Predicated region
      $region37: #{tpu_custom_call.1} parent=5 // pred_check
        _
      $region38: #{tpu_custom_call.1} parent=5 // pred_check_branch
        %206 = sbr.rel (%p203) target = $region40
      $region39: #{tpu_custom_call.1} parent=5 // pred_region
        %s207 = ssub.s32 %s15, 1
        // Predicated region
        $region41: #{tpu_custom_call.1} parent=39 // pred_check
          %p208 = pneg %p62
        $region42: #{tpu_custom_call.1} parent=39 // pred_check_branch
          %210 = sbr.rel (%p208) target = $region44
        $region43: #{tpu_custom_call.1} parent=39 // pred_region
          %211 = dma.done [#allocation3], 6144
        $region44: #{tpu_custom_call.1} parent=39 // pred_fallthru
          _
        %s212 = smul.u32 2, %s20
        %p213 = scmp.lt.s32.totalorder %s212, 3
        %s214 = scalar_select %p213, %s212, 3
        %s215 = smul.addr %s214, 4
        %s216 = scalar_lea.vmem %s0, %s215
        %p217 = pneg %p41
        %p218 = pneg %p38
        %p219 = pneg %p62
        %p220 = pneg %p59
        %p221 = pneg %p83
        %p222 = pneg %p80
        %p223 = pneg %p104
        %p224 = pneg %p101
        %p225 = pneg %p125
        %p226 = pneg %p122
        %p227 = pneg %p151
        %p228 = pneg %p148
        %s229 = sand.u32 %s138, 1
        %s230 = scalar_lea.sflag [#allocation4], %s229
        %s231 = sand.u32 %s138, 1
        %s232 = smul.addr %s231, 16
        %s233 = scalar_lea.vmem [#allocation5], %s232
        %s234 = smul.u32 2, %s20
        %p235 = scmp.lt.s32.totalorder %s234, 3
        %s236 = scalar_select %p235, %s234, 3
        %s237 = smul.addr %s236, 4
        %s238 = scalar_lea.vmem %s0, %s237
        %s239 = smul.u32 2, %s20
        %s240 = smul.u32 2, %s20
        %v241 = vld [vmem:[%s238] sm:$0xff]
        %v242 = vld [vmem:[%s2] sm:$0xff]
        %v243 = vld [vmem:[%s2 + $0x8] sm:$0xff]
        %v244 = vld [vmem:[%s2 + $0x10] sm:$0xff]
        %v246 = vcombine.high %v241, %v241
        %vm247 = vcmask 31744
        %v249 = vsel %vm247, %v242, 0
        %v252 = vsel %vm247, %v243, 0
        %v255 = vsel %vm247, %v244, 0
        %vm257 = vcmask 1043456
        %v258 = vsel %vm257, %v241, 0
        %v260 = vsel %vm257, %v246, 0
        %262 = vmatprep.subr.mxu0 0.0
        %263 = vmatpush1.msra.mxu0 0.0
        %264 = vmatprep.subr.mxu0 0.0
        %265 = vmatpush1.msra.mxu0 0.0
        %266 = vmatprep.subr.mxu0 0.0
        %267 = vmatpush1.msra.mxu0 0.0
        %268 = vmatprep.subr.mxu0 0.0
        %269 = vmatpush1.msra.mxu0 0.0
        %270 = vmatprep.subr.mxu0 0.0
        %271 = vmatpush1.msra.mxu0 0.0
        %272 = vmatprep.subr.mxu0 0.0
        %273 = vmatpush1.msra.mxu0 0.0
        %274 = vmatprep.subr.mxu0 0.0
        %275 = vmatpush1.msra.mxu0 0.0
        %276 = vmatprep.subr.mxu0 0.0
        %277 = vmatpush1.msra.mxu0 0.0
        %278 = vmatprep.subr.mxu0 0.0
        %279 = vmatpush1.msra.mxu0 0.0
        %280 = vmatprep.subr.mxu0 0.0
        %281 = vmatpush1.msra.mxu0 0.0
        %282 = vmatprep.subr.mxu0 0.0
        %283 = vmatpush1.msra.mxu0 0.0
        %284 = vmatprep.subr.mxu0 0.0
        %285 = vmatpush1.msra.mxu0 0.0
        %286 = vmatprep.subr.mxu0 0.0
        %287 = vmatpush1.msra.mxu0 0.0
        %288 = vmatprep.subr.mxu0 0.0
        %289 = vmatpush1.msra.mxu0 0.0
        %290 = vmatprep.subr.mxu0 0.0
        %291 = vmatpush1.msra.mxu0 0.0
        %292 = vmatprep.subr.mxu0 %v260
        %293 = vmatpush1.msra.mxu0 %v258
        %294 = vmatprep.subr.mxu0 0.0
        %295 = vmatpush2.msra.mxu0 0.0
        %296 = vmatprep.subr.mxu0 0.0
        %297 = vmatpush2.msra.mxu0 0.0
        %298 = vmatprep.subr.mxu0 0.0
        %299 = vmatpush2.msra.mxu0 0.0
        %300 = vmatprep.subr.mxu0 0.0
        %301 = vmatpush2.msra.mxu0 0.0
        %302 = vmatprep.subr.mxu0 0.0
        %303 = vmatpush2.msra.mxu0 0.0
        %304 = vmatprep.subr.mxu0 0.0
        %305 = vmatpush2.msra.mxu0 0.0
        %306 = vmatprep.subr.mxu0 0.0
        %307 = vmatpush2.msra.mxu0 0.0
        %308 = vmatprep.subr.mxu0 0.0
        %309 = vmatpush2.msra.mxu0 0.0
        %310 = vmatprep.subr.mxu0 0.0
        %311 = vmatpush2.msra.mxu0 0.0
        %312 = vmatprep.subr.mxu0 0.0
        %313 = vmatpush2.msra.mxu0 0.0
        %314 = vmatprep.subr.mxu0 0.0
        %315 = vmatpush2.msra.mxu0 0.0
        %316 = vmatprep.subr.mxu0 0.0
        %317 = vmatpush2.msra.mxu0 0.0
        %318 = vmatprep.subr.mxu0 0.0
        %319 = vmatpush2.msra.mxu0 0.0
        %320 = vmatprep.subr.mxu0 0.0
        %321 = vmatpush2.msra.mxu0 0.0
        %322 = vmatprep.subr.mxu0 0.0
        %323 = vmatpush2.msra.mxu0 0.0
        %324 = vmatprep.subr.mxu0 0.0
        %325 = vmatpush2.msra.mxu0 0.0
        %326 = vmatprep.mubr.f32.mxu0 0.0
        %327 = vmatmul.mubr.f32.gmra.mxu0 %v249
        %v328 = vpop.f32.mrf.mxu0
        %v329 = vadd.f32 0.0, %v328
        %v330 = vpop.f32.mrf.mxu0
        %v331 = vadd.f32 0.0, %v330
        %332 = vmatprep.mubr.f32.mxu0 0.0
        %333 = vmatmul.mubr.f32.gmra.mxu0 %v252
        %v334 = vpop.f32.mrf.mxu0
        %v335 = vadd.f32 0.0, %v334
        %v336 = vpop.f32.mrf.mxu0
        %v337 = vadd.f32 0.0, %v336
        %338 = vmatprep.mubr.f32.mxu0 0.0
        %339 = vmatmul.mubr.f32.gmra.mxu0 %v255
        %v340 = vpop.f32.mrf.mxu0
        %v341 = vadd.f32 0.0, %v340
        %v342 = vpop.f32.mrf.mxu0
        %v343 = vadd.f32 0.0, %v342
        %344 = vdwg.mxu0
        %v345 = vld [vmem:[#allocation2] sm:$0xff]
        %v346 = vld [vmem:[#allocation2 + $0x8] sm:$0xff]
        %v347 = vld [vmem:[#allocation2 + $0x10] sm:$0xff]
        %v348 = vld [vmem:[#allocation2 + $0x18] sm:$0xff]
        %v349 = vld [vmem:[#allocation2 + $0x20] sm:$0xff]
        %v350 = vld [vmem:[#allocation2 + $0x28] sm:$0xff]
        %v351 = vld [vmem:[#allocation2 + $0x30] sm:$0xff]
        %v352 = vld [vmem:[#allocation2 + $0x38] sm:$0xff]
        %v353 = vld [vmem:[#allocation2 + $0x40] sm:$0xff]
        %v354 = vld [vmem:[#allocation2 + $0x48] sm:$0xff]
        %v355 = vld [vmem:[#allocation2 + $0x50] sm:$0xff]
        %v356 = vld [vmem:[#allocation2 + $0x58] sm:$0xff]
        %v357 = vld [vmem:[#allocation2 + $0x60] sm:$0xff]
        %v358 = vld [vmem:[#allocation2 + $0x68] sm:$0xff]
        %v359 = vld [vmem:[#allocation2 + $0x70] sm:$0xff]
        %v360 = vld [vmem:[#allocation2 + $0x78] sm:$0xff]
        %s361 = scalar_lea.vmem [#allocation2], 128
        %v362 = vld [vmem:[%s361] sm:$0xff]
        %v363 = vld [vmem:[%s361 + $0x8] sm:$0xff]
        %v364 = vld [vmem:[%s361 + $0x10] sm:$0xff]
        %v365 = vld [vmem:[%s361 + $0x18] sm:$0xff]
        %v366 = vld [vmem:[%s361 + $0x20] sm:$0xff]
        %v367 = vld [vmem:[%s361 + $0x28] sm:$0xff]
        %v368 = vld [vmem:[%s361 + $0x30] sm:$0xff]
        %v369 = vld [vmem:[%s361 + $0x38] sm:$0xff]
        %v370 = vld [vmem:[%s361 + $0x40] sm:$0xff]
        %v371 = vld [vmem:[%s361 + $0x48] sm:$0xff]
        %v372 = vld [vmem:[%s361 + $0x50] sm:$0xff]
        %v373 = vld [vmem:[%s361 + $0x58] sm:$0xff]
        %v374 = vld [vmem:[%s361 + $0x60] sm:$0xff]
        %v375 = vld [vmem:[%s361 + $0x68] sm:$0xff]
        %v376 = vld [vmem:[%s361 + $0x70] sm:$0xff]
        %v377 = vld [vmem:[%s361 + $0x78] sm:$0xff]
        %378 = vmatprep.subr.mxu0 0.0
        %379 = vmatpush1.msra.mxu0 %v377
        %380 = vmatprep.subr.mxu0 0.0
        %381 = vmatpush1.msra.mxu0 %v376
        %382 = vmatprep.subr.mxu0 0.0
        %383 = vmatpush1.msra.mxu0 %v375
        %384 = vmatprep.subr.mxu0 0.0
        %385 = vmatpush1.msra.mxu0 %v374
        %386 = vmatprep.subr.mxu0 0.0
        %387 = vmatpush1.msra.mxu0 %v373
        %388 = vmatprep.subr.mxu0 0.0
        %389 = vmatpush1.msra.mxu0 %v372
        %390 = vmatprep.subr.mxu0 0.0
        %391 = vmatpush1.msra.mxu0 %v371
        %392 = vmatprep.subr.mxu0 0.0
        %393 = vmatpush1.msra.mxu0 %v370
        %394 = vmatprep.subr.mxu0 0.0
        %395 = vmatpush1.msra.mxu0 %v369
        %396 = vmatprep.subr.mxu0 0.0
        %397 = vmatpush1.msra.mxu0 %v368
        %398 = vmatprep.subr.mxu0 0.0
        %399 = vmatpush1.msra.mxu0 %v367
        %400 = vmatprep.subr.mxu0 0.0
        %401 = vmatpush1.msra.mxu0 %v366
        %402 = vmatprep.subr.mxu0 0.0
        %403 = vmatpush1.msra.mxu0 %v365
        %404 = vmatprep.subr.mxu0 0.0
        %405 = vmatpush1.msra.mxu0 %v364
        %406 = vmatprep.subr.mxu0 0.0
        %407 = vmatpush1.msra.mxu0 %v363
        %408 = vmatprep.subr.mxu0 0.0
        %409 = vmatpush1.msra.mxu0 %v362
        %410 = vmatprep.subr.mxu0 0.0
        %411 = vmatpush2.msra.mxu0 0.0
        %412 = vmatprep.subr.mxu0 0.0
        %413 = vmatpush2.msra.mxu0 0.0
        %414 = vmatprep.subr.mxu0 0.0
        %415 = vmatpush2.msra.mxu0 0.0
        %416 = vmatprep.subr.mxu0 0.0
        %417 = vmatpush2.msra.mxu0 0.0
        %418 = vmatprep.subr.mxu0 0.0
        %419 = vmatpush2.msra.mxu0 0.0
        %420 = vmatprep.subr.mxu0 0.0
        %421 = vmatpush2.msra.mxu0 0.0
        %422 = vmatprep.subr.mxu0 0.0
        %423 = vmatpush2.msra.mxu0 0.0
        %424 = vmatprep.subr.mxu0 0.0
        %425 = vmatpush2.msra.mxu0 0.0
        %426 = vmatprep.subr.mxu0 0.0
        %427 = vmatpush2.msra.mxu0 0.0
        %428 = vmatprep.subr.mxu0 0.0
        %429 = vmatpush2.msra.mxu0 0.0
        %430 = vmatprep.subr.mxu0 0.0
        %431 = vmatpush2.msra.mxu0 0.0
        %432 = vmatprep.subr.mxu0 0.0
        %433 = vmatpush2.msra.mxu0 0.0
        %434 = vmatprep.subr.mxu0 0.0
        %435 = vmatpush2.msra.mxu0 0.0
        %436 = vmatprep.subr.mxu0 0.0
        %437 = vmatpush2.msra.mxu0 0.0
        %438 = vmatprep.subr.mxu0 0.0
        %439 = vmatpush2.msra.mxu0 0.0
        %440 = vmatprep.subr.mxu0 0.0
        %441 = vmatpush2.msra.mxu0 0.0
        %442 = vmatprep.mubr.f32.mxu0 0.0
        %443 = vmatmul.mubr.f32.gmra.mxu0 %v335
        %v444 = vpop.f32.mrf.mxu0
        %v445 = vadd.f32 0.0, %v444
        %v446 = vpop.f32.mrf.mxu0
        %447 = vdwg.mxu0
        %448 = vmatprep.subr.mxu0 0.0
        %449 = vmatpush1.msra.mxu0 %v360
        %450 = vmatprep.subr.mxu0 0.0
        %451 = vmatpush1.msra.mxu0 %v359
        %452 = vmatprep.subr.mxu0 0.0
        %453 = vmatpush1.msra.mxu0 %v358
        %454 = vmatprep.subr.mxu0 0.0
        %455 = vmatpush1.msra.mxu0 %v357
        %456 = vmatprep.subr.mxu0 0.0
        %457 = vmatpush1.msra.mxu0 %v356
        %458 = vmatprep.subr.mxu0 0.0
        %459 = vmatpush1.msra.mxu0 %v355
        %460 = vmatprep.subr.mxu0 0.0
        %461 = vmatpush1.msra.mxu0 %v354
        %462 = vmatprep.subr.mxu0 0.0
        %463 = vmatpush1.msra.mxu0 %v353
        %464 = vmatprep.subr.mxu0 0.0
        %465 = vmatpush1.msra.mxu0 %v352
        %466 = vmatprep.subr.mxu0 0.0
        %467 = vmatpush1.msra.mxu0 %v351
        %468 = vmatprep.subr.mxu0 0.0
        %469 = vmatpush1.msra.mxu0 %v350
        %470 = vmatprep.subr.mxu0 0.0
        %471 = vmatpush1.msra.mxu0 %v349
        %472 = vmatprep.subr.mxu0 0.0
        %473 = vmatpush1.msra.mxu0 %v348
        %474 = vmatprep.subr.mxu0 0.0
        %475 = vmatpush1.msra.mxu0 %v347
        %476 = vmatprep.subr.mxu0 0.0
        %477 = vmatpush1.msra.mxu0 %v346
        %478 = vmatprep.subr.mxu0 0.0
        %479 = vmatpush1.msra.mxu0 %v345
        %480 = vmatprep.subr.mxu0 0.0
        %481 = vmatpush2.msra.mxu0 0.0
        %482 = vmatprep.subr.mxu0 0.0
        %483 = vmatpush2.msra.mxu0 0.0
        %484 = vmatprep.subr.mxu0 0.0
        %485 = vmatpush2.msra.mxu0 0.0
        %486 = vmatprep.subr.mxu0 0.0
        %487 = vmatpush2.msra.mxu0 0.0
        %488 = vmatprep.subr.mxu0 0.0
        %489 = vmatpush2.msra.mxu0 0.0
        %490 = vmatprep.subr.mxu0 0.0
        %491 = vmatpush2.msra.mxu0 0.0
        %492 = vmatprep.subr.mxu0 0.0
        %493 = vmatpush2.msra.mxu0 0.0
        %494 = vmatprep.subr.mxu0 0.0
        %495 = vmatpush2.msra.mxu0 0.0
        %496 = vmatprep.subr.mxu0 0.0
        %497 = vmatpush2.msra.mxu0 0.0
        %498 = vmatprep.subr.mxu0 0.0
        %499 = vmatpush2.msra.mxu0 0.0
        %500 = vmatprep.subr.mxu0 0.0
        %501 = vmatpush2.msra.mxu0 0.0
        %502 = vmatprep.subr.mxu0 0.0
        %503 = vmatpush2.msra.mxu0 0.0
        %504 = vmatprep.subr.mxu0 0.0
        %505 = vmatpush2.msra.mxu0 0.0
        %506 = vmatprep.subr.mxu0 0.0
        %507 = vmatpush2.msra.mxu0 0.0
        %508 = vmatprep.subr.mxu0 0.0
        %509 = vmatpush2.msra.mxu0 0.0
        %510 = vmatprep.subr.mxu0 0.0
        %511 = vmatpush2.msra.mxu0 0.0
        %512 = vmatprep.mubr.f32.mxu0 0.0
        %513 = vmatmul.mubr.f32.gmra.mxu0 %v329
        %v514 = vpop.f32.mrf.mxu0
        %v515 = vadd.f32 %v445, %v514
        %v516 = vpop.f32.mrf.mxu0
        %517 = vdwg.mxu0
        %s518 = scalar_lea.vmem [#allocation2], 256
        %v519 = vld [vmem:[%s518] sm:$0xff]
        %v520 = vld [vmem:[%s518 + $0x8] sm:$0xff]
        %v521 = vld [vmem:[%s518 + $0x10] sm:$0xff]
        %v522 = vld [vmem:[%s518 + $0x18] sm:$0xff]
        %v523 = vld [vmem:[%s518 + $0x20] sm:$0xff]
        %v524 = vld [vmem:[%s518 + $0x28] sm:$0xff]
        %v525 = vld [vmem:[%s518 + $0x30] sm:$0xff]
        %v526 = vld [vmem:[%s518 + $0x38] sm:$0xff]
        %v527 = vld [vmem:[%s518 + $0x40] sm:$0xff]
        %v528 = vld [vmem:[%s518 + $0x48] sm:$0xff]
        %v529 = vld [vmem:[%s518 + $0x50] sm:$0xff]
        %v530 = vld [vmem:[%s518 + $0x58] sm:$0xff]
        %v531 = vld [vmem:[%s518 + $0x60] sm:$0xff]
        %v532 = vld [vmem:[%s518 + $0x68] sm:$0xff]
        %v533 = vld [vmem:[%s518 + $0x70] sm:$0xff]
        %v534 = vld [vmem:[%s518 + $0x78] sm:$0xff]
        %535 = vmatprep.subr.mxu0 0.0
        %536 = vmatpush1.msra.mxu0 %v534
        %537 = vmatprep.subr.mxu0 0.0
        %538 = vmatpush1.msra.mxu0 %v533
        %539 = vmatprep.subr.mxu0 0.0
        %540 = vmatpush1.msra.mxu0 %v532
        %541 = vmatprep.subr.mxu0 0.0
        %542 = vmatpush1.msra.mxu0 %v531
        %543 = vmatprep.subr.mxu0 0.0
        %544 = vmatpush1.msra.mxu0 %v530
        %545 = vmatprep.subr.mxu0 0.0
        %546 = vmatpush1.msra.mxu0 %v529
        %547 = vmatprep.subr.mxu0 0.0
        %548 = vmatpush1.msra.mxu0 %v528
        %549 = vmatprep.subr.mxu0 0.0
        %550 = vmatpush1.msra.mxu0 %v527
        %551 = vmatprep.subr.mxu0 0.0
        %552 = vmatpush1.msra.mxu0 %v526
        %553 = vmatprep.subr.mxu0 0.0
        %554 = vmatpush1.msra.mxu0 %v525
        %555 = vmatprep.subr.mxu0 0.0
        %556 = vmatpush1.msra.mxu0 %v524
        %557 = vmatprep.subr.mxu0 0.0
        %558 = vmatpush1.msra.mxu0 %v523
        %559 = vmatprep.subr.mxu0 0.0
        %560 = vmatpush1.msra.mxu0 %v522
        %561 = vmatprep.subr.mxu0 0.0
        %562 = vmatpush1.msra.mxu0 %v521
        %563 = vmatprep.subr.mxu0 0.0
        %564 = vmatpush1.msra.mxu0 %v520
        %565 = vmatprep.subr.mxu0 0.0
        %566 = vmatpush1.msra.mxu0 %v519
        %567 = vmatprep.subr.mxu0 0.0
        %568 = vmatpush2.msra.mxu0 0.0
        %569 = vmatprep.subr.mxu0 0.0
        %570 = vmatpush2.msra.mxu0 0.0
        %571 = vmatprep.subr.mxu0 0.0
        %572 = vmatpush2.msra.mxu0 0.0
        %573 = vmatprep.subr.mxu0 0.0
        %574 = vmatpush2.msra.mxu0 0.0
        %575 = vmatprep.subr.mxu0 0.0
        %576 = vmatpush2.msra.mxu0 0.0
        %577 = vmatprep.subr.mxu0 0.0
        %578 = vmatpush2.msra.mxu0 0.0
        %579 = vmatprep.subr.mxu0 0.0
        %580 = vmatpush2.msra.mxu0 0.0
        %581 = vmatprep.subr.mxu0 0.0
        %582 = vmatpush2.msra.mxu0 0.0
        %583 = vmatprep.subr.mxu0 0.0
        %584 = vmatpush2.msra.mxu0 0.0
        %585 = vmatprep.subr.mxu0 0.0
        %586 = vmatpush2.msra.mxu0 0.0
        %587 = vmatprep.subr.mxu0 0.0
        %588 = vmatpush2.msra.mxu0 0.0
        %589 = vmatprep.subr.mxu0 0.0
        %590 = vmatpush2.msra.mxu0 0.0
        %591 = vmatprep.subr.mxu0 0.0
        %592 = vmatpush2.msra.mxu0 0.0
        %593 = vmatprep.subr.mxu0 0.0
        %594 = vmatpush2.msra.mxu0 0.0
        %595 = vmatprep.subr.mxu0 0.0
        %596 = vmatpush2.msra.mxu0 0.0
        %597 = vmatprep.subr.mxu0 0.0
        %598 = vmatpush2.msra.mxu0 0.0
        %599 = vmatprep.mubr.f32.mxu0 0.0
        %600 = vmatmul.mubr.f32.gmra.mxu0 %v341
        %v601 = vpop.f32.mrf.mxu0
        %v602 = vadd.f32 0.0, %v601
        %v603 = vpop.f32.mrf.mxu0
        %604 = vdwg.mxu0
        %v605 = vadd.f32 %v515, %v602
        %606 = vmatprep.subr.mxu0 0.0
        %607 = vmatpush1.msra.mxu0 %v377
        %608 = vmatprep.subr.mxu0 0.0
        %609 = vmatpush1.msra.mxu0 %v376
        %610 = vmatprep.subr.mxu0 0.0
        %611 = vmatpush1.msra.mxu0 %v375
        %612 = vmatprep.subr.mxu0 0.0
        %613 = vmatpush1.msra.mxu0 %v374
        %614 = vmatprep.subr.mxu0 0.0
        %615 = vmatpush1.msra.mxu0 %v373
        %616 = vmatprep.subr.mxu0 0.0
        %617 = vmatpush1.msra.mxu0 %v372
        %618 = vmatprep.subr.mxu0 0.0
        %619 = vmatpush1.msra.mxu0 %v371
        %620 = vmatprep.subr.mxu0 0.0
        %621 = vmatpush1.msra.mxu0 %v370
        %622 = vmatprep.subr.mxu0 0.0
        %623 = vmatpush1.msra.mxu0 %v369
        %624 = vmatprep.subr.mxu0 0.0
        %625 = vmatpush1.msra.mxu0 %v368
        %626 = vmatprep.subr.mxu0 0.0
        %627 = vmatpush1.msra.mxu0 %v367
        %628 = vmatprep.subr.mxu0 0.0
        %629 = vmatpush1.msra.mxu0 %v366
        %630 = vmatprep.subr.mxu0 0.0
        %631 = vmatpush1.msra.mxu0 %v365
        %632 = vmatprep.subr.mxu0 0.0
        %633 = vmatpush1.msra.mxu0 %v364
        %634 = vmatprep.subr.mxu0 0.0
        %635 = vmatpush1.msra.mxu0 %v363
        %636 = vmatprep.subr.mxu0 0.0
        %637 = vmatpush1.msra.mxu0 %v362
        %638 = vmatprep.subr.mxu0 0.0
        %639 = vmatpush2.msra.mxu0 0.0
        %640 = vmatprep.subr.mxu0 0.0
        %641 = vmatpush2.msra.mxu0 0.0
        %642 = vmatprep.subr.mxu0 0.0
        %643 = vmatpush2.msra.mxu0 0.0
        %644 = vmatprep.subr.mxu0 0.0
        %645 = vmatpush2.msra.mxu0 0.0
        %646 = vmatprep.subr.mxu0 0.0
        %647 = vmatpush2.msra.mxu0 0.0
        %648 = vmatprep.subr.mxu0 0.0
        %649 = vmatpush2.msra.mxu0 0.0
        %650 = vmatprep.subr.mxu0 0.0
        %651 = vmatpush2.msra.mxu0 0.0
        %652 = vmatprep.subr.mxu0 0.0
        %653 = vmatpush2.msra.mxu0 0.0
        %654 = vmatprep.subr.mxu0 0.0
        %655 = vmatpush2.msra.mxu0 0.0
        %656 = vmatprep.subr.mxu0 0.0
        %657 = vmatpush2.msra.mxu0 0.0
        %658 = vmatprep.subr.mxu0 0.0
        %659 = vmatpush2.msra.mxu0 0.0
        %660 = vmatprep.subr.mxu0 0.0
        %661 = vmatpush2.msra.mxu0 0.0
        %662 = vmatprep.subr.mxu0 0.0
        %663 = vmatpush2.msra.mxu0 0.0
        %664 = vmatprep.subr.mxu0 0.0
        %665 = vmatpush2.msra.mxu0 0.0
        %666 = vmatprep.subr.mxu0 0.0
        %667 = vmatpush2.msra.mxu0 0.0
        %668 = vmatprep.subr.mxu0 0.0
        %669 = vmatpush2.msra.mxu0 0.0
        %670 = vmatprep.mubr.f32.mxu0 0.0
        %671 = vmatmul.mubr.f32.gmra.mxu0 %v337
        %v672 = vpop.f32.mrf.mxu0
        %v673 = vadd.f32 0.0, %v672
        %v674 = vpop.f32.mrf.mxu0
        %675 = vdwg.mxu0
        %676 = vmatprep.subr.mxu0 0.0
        %677 = vmatpush1.msra.mxu0 %v360
        %678 = vmatprep.subr.mxu0 0.0
        %679 = vmatpush1.msra.mxu0 %v359
        %680 = vmatprep.subr.mxu0 0.0
        %681 = vmatpush1.msra.mxu0 %v358
        %682 = vmatprep.subr.mxu0 0.0
        %683 = vmatpush1.msra.mxu0 %v357
        %684 = vmatprep.subr.mxu0 0.0
        %685 = vmatpush1.msra.mxu0 %v356
        %686 = vmatprep.subr.mxu0 0.0
        %687 = vmatpush1.msra.mxu0 %v355
        %688 = vmatprep.subr.mxu0 0.0
        %689 = vmatpush1.msra.mxu0 %v354
        %690 = vmatprep.subr.mxu0 0.0
        %691 = vmatpush1.msra.mxu0 %v353
        %692 = vmatprep.subr.mxu0 0.0
        %693 = vmatpush1.msra.mxu0 %v352
        %694 = vmatprep.subr.mxu0 0.0
        %695 = vmatpush1.msra.mxu0 %v351
        %696 = vmatprep.subr.mxu0 0.0
        %697 = vmatpush1.msra.mxu0 %v350
        %698 = vmatprep.subr.mxu0 0.0
        %699 = vmatpush1.msra.mxu0 %v349
        %700 = vmatprep.subr.mxu0 0.0
        %701 = vmatpush1.msra.mxu0 %v348
        %702 = vmatprep.subr.mxu0 0.0
        %703 = vmatpush1.msra.mxu0 %v347
        %704 = vmatprep.subr.mxu0 0.0
        %705 = vmatpush1.msra.mxu0 %v346
        %706 = vmatprep.subr.mxu0 0.0
        %707 = vmatpush1.msra.mxu0 %v345
        %708 = vmatprep.subr.mxu0 0.0
        %709 = vmatpush2.msra.mxu0 0.0
        %710 = vmatprep.subr.mxu0 0.0
        %711 = vmatpush2.msra.mxu0 0.0
        %712 = vmatprep.subr.mxu0 0.0
        %713 = vmatpush2.msra.mxu0 0.0
        %714 = vmatprep.subr.mxu0 0.0
        %715 = vmatpush2.msra.mxu0 0.0
        %716 = vmatprep.subr.mxu0 0.0
        %717 = vmatpush2.msra.mxu0 0.0
        %718 = vmatprep.subr.mxu0 0.0
        %719 = vmatpush2.msra.mxu0 0.0
        %720 = vmatprep.subr.mxu0 0.0
        %721 = vmatpush2.msra.mxu0 0.0
        %722 = vmatprep.subr.mxu0 0.0
        %723 = vmatpush2.msra.mxu0 0.0
        %724 = vmatprep.subr.mxu0 0.0
        %725 = vmatpush2.msra.mxu0 0.0
        %726 = vmatprep.subr.mxu0 0.0
        %727 = vmatpush2.msra.mxu0 0.0
        %728 = vmatprep.subr.mxu0 0.0
        %729 = vmatpush2.msra.mxu0 0.0
        %730 = vmatprep.subr.mxu0 0.0
        %731 = vmatpush2.msra.mxu0 0.0
        %732 = vmatprep.subr.mxu0 0.0
        %733 = vmatpush2.msra.mxu0 0.0
        %734 = vmatprep.subr.mxu0 0.0
        %735 = vmatpush2.msra.mxu0 0.0
        %736 = vmatprep.subr.mxu0 0.0
        %737 = vmatpush2.msra.mxu0 0.0
        %738 = vmatprep.subr.mxu0 0.0
        %739 = vmatpush2.msra.mxu0 0.0
        %740 = vmatprep.mubr.f32.mxu0 0.0
        %741 = vmatmul.mubr.f32.gmra.mxu0 %v331
        %v742 = vpop.f32.mrf.mxu0
        %v743 = vadd.f32 %v673, %v742
        %v744 = vpop.f32.mrf.mxu0
        %745 = vdwg.mxu0
        %746 = vmatprep.subr.mxu0 0.0
        %747 = vmatpush1.msra.mxu0 %v534
        %748 = vmatprep.subr.mxu0 0.0
        %749 = vmatpush1.msra.mxu0 %v533
        %750 = vmatprep.subr.mxu0 0.0
        %751 = vmatpush1.msra.mxu0 %v532
        %752 = vmatprep.subr.mxu0 0.0
        %753 = vmatpush1.msra.mxu0 %v531
        %754 = vmatprep.subr.mxu0 0.0
        %755 = vmatpush1.msra.mxu0 %v530
        %756 = vmatprep.subr.mxu0 0.0
        %757 = vmatpush1.msra.mxu0 %v529
        %758 = vmatprep.subr.mxu0 0.0
        %759 = vmatpush1.msra.mxu0 %v528
        %760 = vmatprep.subr.mxu0 0.0
        %761 = vmatpush1.msra.mxu0 %v527
        %762 = vmatprep.subr.mxu0 0.0
        %763 = vmatpush1.msra.mxu0 %v526
        %764 = vmatprep.subr.mxu0 0.0
        %765 = vmatpush1.msra.mxu0 %v525
        %766 = vmatprep.subr.mxu0 0.0
        %767 = vmatpush1.msra.mxu0 %v524
        %768 = vmatprep.subr.mxu0 0.0
        %769 = vmatpush1.msra.mxu0 %v523
        %770 = vmatprep.subr.mxu0 0.0
        %771 = vmatpush1.msra.mxu0 %v522
        %772 = vmatprep.subr.mxu0 0.0
        %773 = vmatpush1.msra.mxu0 %v521
        %774 = vmatprep.subr.mxu0 0.0
        %775 = vmatpush1.msra.mxu0 %v520
        %776 = vmatprep.subr.mxu0 0.0
        %777 = vmatpush1.msra.mxu0 %v519
        %778 = vmatprep.subr.mxu0 0.0
        %779 = vmatpush2.msra.mxu0 0.0
        %780 = vmatprep.subr.mxu0 0.0
        %781 = vmatpush2.msra.mxu0 0.0
        %782 = vmatprep.subr.mxu0 0.0
        %783 = vmatpush2.msra.mxu0 0.0
        %784 = vmatprep.subr.mxu0 0.0
        %785 = vmatpush2.msra.mxu0 0.0
        %786 = vmatprep.subr.mxu0 0.0
        %787 = vmatpush2.msra.mxu0 0.0
        %788 = vmatprep.subr.mxu0 0.0
        %789 = vmatpush2.msra.mxu0 0.0
        %790 = vmatprep.subr.mxu0 0.0
        %791 = vmatpush2.msra.mxu0 0.0
        %792 = vmatprep.subr.mxu0 0.0
        %793 = vmatpush2.msra.mxu0 0.0
        %794 = vmatprep.subr.mxu0 0.0
        %795 = vmatpush2.msra.mxu0 0.0
        %796 = vmatprep.subr.mxu0 0.0
        %797 = vmatpush2.msra.mxu0 0.0
        %798 = vmatprep.subr.mxu0 0.0
        %799 = vmatpush2.msra.mxu0 0.0
        %800 = vmatprep.subr.mxu0 0.0
        %801 = vmatpush2.msra.mxu0 0.0
        %802 = vmatprep.subr.mxu0 0.0
        %803 = vmatpush2.msra.mxu0 0.0
        %804 = vmatprep.subr.mxu0 0.0
        %805 = vmatpush2.msra.mxu0 0.0
        %806 = vmatprep.subr.mxu0 0.0
        %807 = vmatpush2.msra.mxu0 0.0
        %808 = vmatprep.subr.mxu0 0.0
        %809 = vmatpush2.msra.mxu0 0.0
        %810 = vmatprep.mubr.f32.mxu0 0.0
        %811 = vmatmul.mubr.f32.gmra.mxu0 %v343
        %v812 = vpop.f32.mrf.mxu0
        %v813 = vadd.f32 0.0, %v812
        %v814 = vpop.f32.mrf.mxu0
        %815 = vdwg.mxu0
        %v816 = vadd.f32 %v743, %v813
        %v817 = vld [vmem:[%s4] sm:$0xff]
        %v818 = vld [vmem:[%s3] sm:$0xff]
        %v820 = vsel %vm247, %v818, 0
        %822 = vmatprep.subr.mxu0 0.0
        %823 = vmatpush1.msra.mxu0 0.0
        %824 = vmatprep.subr.mxu0 0.0
        %825 = vmatpush1.msra.mxu0 0.0
        %826 = vmatprep.subr.mxu0 0.0
        %827 = vmatpush1.msra.mxu0 0.0
        %828 = vmatprep.subr.mxu0 0.0
        %829 = vmatpush1.msra.mxu0 0.0
        %830 = vmatprep.subr.mxu0 0.0
        %831 = vmatpush1.msra.mxu0 0.0
        %832 = vmatprep.subr.mxu0 0.0
        %833 = vmatpush1.msra.mxu0 0.0
        %834 = vmatprep.subr.mxu0 0.0
        %835 = vmatpush1.msra.mxu0 0.0
        %836 = vmatprep.subr.mxu0 0.0
        %837 = vmatpush1.msra.mxu0 0.0
        %838 = vmatprep.subr.mxu0 0.0
        %839 = vmatpush1.msra.mxu0 0.0
        %840 = vmatprep.subr.mxu0 0.0
        %841 = vmatpush1.msra.mxu0 0.0
        %842 = vmatprep.subr.mxu0 0.0
        %843 = vmatpush1.msra.mxu0 0.0
        %844 = vmatprep.subr.mxu0 0.0
        %845 = vmatpush1.msra.mxu0 0.0
        %846 = vmatprep.subr.mxu0 0.0
        %847 = vmatpush1.msra.mxu0 0.0
        %848 = vmatprep.subr.mxu0 0.0
        %849 = vmatpush1.msra.mxu0 0.0
        %850 = vmatprep.subr.mxu0 0.0
        %851 = vmatpush1.msra.mxu0 0.0
        %852 = vmatprep.subr.mxu0 %v260
        %853 = vmatpush1.msra.mxu0 %v258
        %854 = vmatprep.subr.mxu0 0.0
        %855 = vmatpush2.msra.mxu0 0.0
        %856 = vmatprep.subr.mxu0 0.0
        %857 = vmatpush2.msra.mxu0 0.0
        %858 = vmatprep.subr.mxu0 0.0
        %859 = vmatpush2.msra.mxu0 0.0
        %860 = vmatprep.subr.mxu0 0.0
        %861 = vmatpush2.msra.mxu0 0.0
        %862 = vmatprep.subr.mxu0 0.0
        %863 = vmatpush2.msra.mxu0 0.0
        %864 = vmatprep.subr.mxu0 0.0
        %865 = vmatpush2.msra.mxu0 0.0
        %866 = vmatprep.subr.mxu0 0.0
        %867 = vmatpush2.msra.mxu0 0.0
        %868 = vmatprep.subr.mxu0 0.0
        %869 = vmatpush2.msra.mxu0 0.0
        %870 = vmatprep.subr.mxu0 0.0
        %871 = vmatpush2.msra.mxu0 0.0
        %872 = vmatprep.subr.mxu0 0.0
        %873 = vmatpush2.msra.mxu0 0.0
        %874 = vmatprep.subr.mxu0 0.0
        %875 = vmatpush2.msra.mxu0 0.0
        %876 = vmatprep.subr.mxu0 0.0
        %877 = vmatpush2.msra.mxu0 0.0
        %878 = vmatprep.subr.mxu0 0.0
        %879 = vmatpush2.msra.mxu0 0.0
        %880 = vmatprep.subr.mxu0 0.0
        %881 = vmatpush2.msra.mxu0 0.0
        %882 = vmatprep.subr.mxu0 0.0
        %883 = vmatpush2.msra.mxu0 0.0
        %884 = vmatprep.subr.mxu0 0.0
        %885 = vmatpush2.msra.mxu0 0.0
        %886 = vmatprep.mubr.f32.mxu0 0.0
        %887 = vmatmul.mubr.f32.gmra.mxu0 %v820
        %v888 = vpop.f32.mrf.mxu0
        %v889 = vadd.f32 0.0, %v888
        %v890 = vpop.f32.mrf.mxu0
        %v891 = vadd.f32 0.0, %v890
        %892 = vdwg.mxu0
        %v893 = vadd.f32 %v605, %v816
        %894 = vadd.xlane.f32.xlu0 %v893
        %v895 = vpop.xlane.xlu0 %894
        %v896 = vmul.f32 %v895, 0.00390625
        %v897 = vmul.f32 %v605, %v605
        %v898 = vmul.f32 %v816, %v816
        %v899 = vadd.f32 %v897, %v898
        %900 = vadd.xlane.f32.xlu0 %v899
        %v901 = vpop.xlane.xlu0 %900
        %v902 = vmul.f32 %v901, 0.00390625
        %v903 = vmul.f32 %v896, %v896
        %v904 = vsub.f32 %v902, %v903
        %v905 = vsub.f32 %v605, %v896
        %v906 = vsub.f32 %v816, %v896
        %v907 = vadd.f32 %v904, 1e-05
        %v908 = vrsqrt.pop %v907
        %v909 = vmul.f32 %v905, %v908
        %v910 = vmul.f32 %v906, %v908
        %912 = vset.pattern.permute.xlu0 0
        %913 = vperm.xlu0 %912, %v817
        %v914 = vpop.permute.xlu0 %913
        %v916 = vmul.f32 %v909, %v914
        %v917 = vmul.f32 %v910, %v914
        %918 = vset.pattern.permute.xlu0 1
        %919 = vperm.xlu0 %918, %v817
        %v920 = vpop.permute.xlu0 %919
        %v922 = vadd.f32 %v916, %v920
        %v923 = vadd.f32 %v917, %v920
        %v924 = vadd.f32 %v889, %v891
        %925 = vadd.xlane.f32.xlu0 %v924
        %v926 = vpop.xlane.xlu0 %925
        %v927 = vmul.f32 %v926, 0.00390625
        %v928 = vmul.f32 %v889, %v889
        %v929 = vmul.f32 %v891, %v891
        %v930 = vadd.f32 %v928, %v929
        %931 = vadd.xlane.f32.xlu0 %v930
        %v932 = vpop.xlane.xlu0 %931
        %v933 = vmul.f32 %v932, 0.00390625
        %v934 = vmul.f32 %v927, %v927
        %v935 = vsub.f32 %v933, %v934
        %v936 = vsub.f32 %v889, %v927
        %v937 = vsub.f32 %v891, %v927
        %v938 = vadd.f32 %v935, 1e-05
        %v939 = vrsqrt.pop %v938
        %v940 = vmul.f32 %v936, %v939
        %v941 = vmul.f32 %v937, %v939
        %942 = vset.pattern.permute.xlu0 2
        %943 = vperm.xlu0 %942, %v817
        %v944 = vpop.permute.xlu0 %943
        %v946 = vmul.f32 %v940, %v944
        %v947 = vmul.f32 %v941, %v944
        %948 = vset.pattern.permute.xlu0 3
        %949 = vperm.xlu0 %948, %v817
        %v950 = vpop.permute.xlu0 %949
        %v952 = vadd.f32 %v946, %v950
        %v953 = vadd.f32 %v947, %v950
        %v954 = vadd.f32 %v922, %v952
        %v955 = vadd.f32 %v923, %v953
        %v956 = vmax.f32 %v954, 0.0
        %v957 = vmax.f32 %v955, 0.0
        %958 = vst [vmem:[%s233] sm:$0xff] %v956
        %959 = vst [vmem:[%s233 + $0x8] sm:$0xff] %v957
        %s960 = sand.u32 %s138, 1
        %s961 = scalar_lea.sflag [#allocation4], %s960
        %s962 = sand.u32 %s138, 1
        %s963 = smul.addr %s962, 16
        %s964 = scalar_lea.vmem [#allocation5], %s963
        // Predicated region
        $region45: #{tpu_custom_call.1} parent=39 // pred_check
          %p965 = pneg %p148
        $region46: #{tpu_custom_call.1} parent=39 // pred_check_branch
          %967 = sbr.rel (%p965) target = $region48
        $region47: #{tpu_custom_call.1} parent=39 // pred_region
          %s968 = smul.u32 2, %s20
          %s970 = ssub.s32 256, 256
          %971 = vsyncadd %s961, %s970
          %s972 = smul.addr %s968, 128
          %s973 = scalar_lea.hbm %s5, %s972
          %s975 = sshll.u32 %s964, 4
          %s976 = int_to_ptr.vmem [resolvable:$true] %s975
          %978 = dma.vmem_to_hbm [thread:$0]  %s976, 256, %s973, %s961
        $region48: #{tpu_custom_call.1} parent=39 // pred_fallthru
          _
      $region40: #{tpu_custom_call.1} parent=5 // pred_fallthru
        _
      %p979 = scmp.le.s32.totalorder 2, %s15
      // Predicated region
      $region49: #{tpu_custom_call.1} parent=5 // pred_check
        %p980 = pneg %p979
      $region50: #{tpu_custom_call.1} parent=5 // pred_check_branch
        %982 = sbr.rel (%p980) target = $region52
      $region51: #{tpu_custom_call.1} parent=5 // pred_region
        %s983 = ssub.s32 %s15, 2
        // Predicated region
        $region53: #{tpu_custom_call.1} parent=51 // pred_check
          %p984 = pneg %p154
        $region54: #{tpu_custom_call.1} parent=51 // pred_check_branch
          %986 = sbr.rel (%p984) target = $region56
        $region55: #{tpu_custom_call.1} parent=51 // pred_region
          %s987 = sand.u32 %s139, 1
          %s988 = scalar_lea.sflag [#allocation4], %s987
          %s989 = sand.u32 %s139, 1
          %s990 = smul.addr %s989, 16
          %s991 = scalar_lea.vmem [#allocation5], %s990
          %992 = dma.done %s988, 256
        $region56: #{tpu_custom_call.1} parent=51 // pred_fallthru
          _
      $region52: #{tpu_custom_call.1} parent=5 // pred_fallthru
        _
    $region6: #{tpu_custom_call.1} parent=1 // loop_footer
      %s19 = sadd.s32 1, %s15
    $region7: #{tpu_custom_call.1} parent=1 // loop_footer_branch
      %14 = sbr.rel target = $region3
    $region8: #{tpu_custom_call.1} parent=1 // loop_exit
      _
    %993 = vsyncpa [#allocation3], 1
    %s994 = scalar_lea.sflag [#allocation3], 1
    %995 = vsyncpa %s994, 1
    %996 = vsyncpa [#allocation4], 1
    %s997 = scalar_lea.sflag [#allocation4], 1
    %998 = vsyncpa %s997, 1

// kernel: tpu_custom_call.1
$region0: #{tpu_custom_call.1}
  #allocation0 [shape = 'u32[]', space=smem, size = 0x4, offset = 0x4, fixed_abs, tag = 'smem constant byte address 0x4 - core index']
  #allocation1 [shape = 'u32[144,128]{1,0:T(1,128)}', space=vmem, size = 0x12000, scoped, tag = 'internal scratch']
  %s0 = inlined_call_operand.vmem [shape: f32[4,512], index: 0, kind: input, shape index: {}]
  %s1 = inlined_call_operand.hbm [shape: f32[3,128,128], index: 1, kind: input, shape index: {}]
  %s2 = inlined_call_operand.vmem [shape: f32[24,4], index: 2, kind: input, shape index: {}]
  %s3 = inlined_call_operand.vmem [shape: f32[8,4], index: 3, kind: input, shape index: {}]
  %s4 = inlined_call_operand.vmem [shape: f32[8,4], index: 4, kind: input, shape index: {}]
  %s5 = inlined_call_operand.hbm [shape: f32[8,512], index: 5, kind: output, shape index: {}]
  %s6 = sld [smem:[#allocation0]]
  $region57: #{tpu_custom_call.1} parent=0
    _
  %s8 = ssub.s32 1, %s6
  %s9 = scalar_select 0, %s8, %s6
  $region1: #{tpu_custom_call.1} parent=0
    #allocation2 [shape = 'u8[196608]{0}', space=vmem, size = 0x30000, scoped, tag = 'input window, operand 1, single buffered']
    #allocation3 [shape = 's32[2]{0}', space=sflag, size = 0x8, scoped, tag = 'scoped memory for tpu_custom_call.1']
    #allocation4 [shape = 's32[2]{0}', space=sflag, size = 0x8, scoped, tag = 'scoped memory for tpu_custom_call.1']
    #allocation5 [shape = 'u8[16384]{0}', space=vmem, size = 0x4000, scoped, tag = 'output window, operand 0']
    %10 = vsyncpa [#allocation3], 0
    %11 = vsyncpa [#allocation4], 0
    %s12 = scalar_lea.sflag [#allocation4], 1
    %13 = vsyncpa %s12, 0
    loop: start=0, step=1, limit=4
    $region2: #{tpu_custom_call.1} parent=1 // loop_pre_header
      _
    $region3: #{tpu_custom_call.1} parent=1 // loop_header
      %s15 = sphi 0, %s19
      %p16 = scmp.ge.s32.totalorder %s15, 4
      %s25 = sphi 0, %s27
      %s28 = sphi 0, %s25
      %s29 = sphi 0, %s28
      %s45 = sphi 0, %s29
      %s49 = sphi 0, %s49
      %s51 = sphi 0, %s49
      %s52 = sphi 0, %s51
      %s66 = sphi 0, %s52
      %s70 = sphi 0, %s70
      %s72 = sphi 0, %s70
      %s73 = sphi 0, %s72
      %s87 = sphi 0, %s73
      %s91 = sphi 0, %s91
      %s93 = sphi 0, %s91
      %s94 = sphi 0, %s93
      %s108 = sphi 0, %s94
      %s112 = sphi 0, %s112
      %s114 = sphi 0, %s112
      %s115 = sphi 0, %s114
      %s129 = sphi 0, %s115
      %s135 = sphi 0, %s137
      %s138 = sphi 0, %s135
      %s139 = sphi 0, %s138
      %s155 = sphi 0, %s139
    $region4: #{tpu_custom_call.1} parent=1 // loop_header_branch
      %18 = sbr.rel (%p16) target = $region8
    $region5: #{tpu_custom_call.1} parent=1 // loop_body
      %s20 = ssub.s32 %s15, 1
      %s21 = ssub.s32 %s15, 2
      %s22 = sadd.s32 %s15, 1
      %s23 = ssub.s32 %s15, %s22
      %p24 = scmp.eq.s32.totalorder %s23, 0
      %s26 = sadd.s32 %s25, 1
      %s27 = scalar_select %p24, %s25, %s26
      %p30 = pneg %p24
      %p31 = scmp.eq.s32.totalorder %s15, 1
      %p32 = por %p30, %p31
      %p33 = scmp.ne.s32.totalorder %s25, %s28
      %p34 = scmp.eq.s32.totalorder %s15, 0
      %p35 = por %p33, %p34
      %p36 = scmp.ne.s32.totalorder %s25, %s28
      %p37 = scmp.eq.s32.totalorder %s20, 1
      %p38 = por %p36, %p37
      %p39 = scmp.ne.s32.totalorder %s28, %s29
      %p40 = scmp.eq.s32.totalorder %s20, 0
      %p41 = por %p39, %p40
      %p42 = scmp.ne.s32.totalorder %s28, %s29
      %p43 = scmp.eq.s32.totalorder %s21, 1
      %p44 = por %p42, %p43
      %p46 = scmp.ne.s32.totalorder %s29, %s45
      %p47 = scmp.eq.s32.totalorder %s21, 0
      %p48 = por %p46, %p47
      %s50 = sadd.s32 %s49, 1
      %p53 = scmp.eq.s32.totalorder %s15, 1
      %p54 = scmp.ne.s32.totalorder %s49, %s51
      %p55 = scmp.eq.s32.totalorder %s15, 0
      %p56 = por %p54, %p55
      %p57 = scmp.ne.s32.totalorder %s49, %s51
      %p58 = scmp.eq.s32.totalorder %s20, 1
      %p59 = por %p57, %p58
      %p60 = scmp.ne.s32.totalorder %s51, %s52
      %p61 = scmp.eq.s32.totalorder %s20, 0
      %p62 = por %p60, %p61
      %p63 = scmp.ne.s32.totalorder %s51, %s52
      %p64 = scmp.eq.s32.totalorder %s21, 1
      %p65 = por %p63, %p64
      %p67 = scmp.ne.s32.totalorder %s52, %s66
      %p68 = scmp.eq.s32.totalorder %s21, 0
      %p69 = por %p67, %p68
      %s71 = sadd.s32 %s70, 1
      %p74 = scmp.eq.s32.totalorder %s15, 1
      %p75 = scmp.ne.s32.totalorder %s70, %s72
      %p76 = scmp.eq.s32.totalorder %s15, 0
      %p77 = por %p75, %p76
      %p78 = scmp.ne.s32.totalorder %s70, %s72
      %p79 = scmp.eq.s32.totalorder %s20, 1
      %p80 = por %p78, %p79
      %p81 = scmp.ne.s32.totalorder %s72, %s73
      %p82 = scmp.eq.s32.totalorder %s20, 0
      %p83 = por %p81, %p82
      %p84 = scmp.ne.s32.totalorder %s72, %s73
      %p85 = scmp.eq.s32.totalorder %s21, 1
      %p86 = por %p84, %p85
      %p88 = scmp.ne.s32.totalorder %s73, %s87
      %p89 = scmp.eq.s32.totalorder %s21, 0
      %p90 = por %p88, %p89
      %s92 = sadd.s32 %s91, 1
      %p95 = scmp.eq.s32.totalorder %s15, 1
      %p96 = scmp.ne.s32.totalorder %s91, %s93
      %p97 = scmp.eq.s32.totalorder %s15, 0
      %p98 = por %p96, %p97
      %p99 = scmp.ne.s32.totalorder %s91, %s93
      %p100 = scmp.eq.s32.totalorder %s20, 1
      %p101 = por %p99, %p100
      %p102 = scmp.ne.s32.totalorder %s93, %s94
      %p103 = scmp.eq.s32.totalorder %s20, 0
      %p104 = por %p102, %p103
      %p105 = scmp.ne.s32.totalorder %s93, %s94
      %p106 = scmp.eq.s32.totalorder %s21, 1
      %p107 = por %p105, %p106
      %p109 = scmp.ne.s32.totalorder %s94, %s108
      %p110 = scmp.eq.s32.totalorder %s21, 0
      %p111 = por %p109, %p110
      %s113 = sadd.s32 %s112, 1
      %p116 = scmp.eq.s32.totalorder %s15, 1
      %p117 = scmp.ne.s32.totalorder %s112, %s114
      %p118 = scmp.eq.s32.totalorder %s15, 0
      %p119 = por %p117, %p118
      %p120 = scmp.ne.s32.totalorder %s112, %s114
      %p121 = scmp.eq.s32.totalorder %s20, 1
      %p122 = por %p120, %p121
      %p123 = scmp.ne.s32.totalorder %s114, %s115
      %p124 = scmp.eq.s32.totalorder %s20, 0
      %p125 = por %p123, %p124
      %p126 = scmp.ne.s32.totalorder %s114, %s115
      %p127 = scmp.eq.s32.totalorder %s21, 1
      %p128 = por %p126, %p127
      %p130 = scmp.ne.s32.totalorder %s115, %s129
      %p131 = scmp.eq.s32.totalorder %s21, 0
      %p132 = por %p130, %p131
      %s133 = ssub.s32 %s15, %s22
      %p134 = scmp.eq.s32.totalorder %s133, 0
      %s136 = sadd.s32 %s135, 1
      %s137 = scalar_select %p134, %s135, %s136
      %p140 = pneg %p134
      %p141 = scmp.eq.s32.totalorder %s15, 1
      %p142 = por %p140, %p141
      %p143 = scmp.ne.s32.totalorder %s135, %s138
      %p144 = scmp.eq.s32.totalorder %s15, 0
      %p145 = por %p143, %p144
      %p146 = scmp.ne.s32.totalorder %s135, %s138
      %p147 = scmp.eq.s32.totalorder %s20, 1
      %p148 = por %p146, %p147
      %p149 = scmp.ne.s32.totalorder %s138, %s139
      %p150 = scmp.eq.s32.totalorder %s20, 0
      %p151 = por %p149, %p150
      %p152 = scmp.ne.s32.totalorder %s138, %s139
      %p153 = scmp.eq.s32.totalorder %s21, 1
      %p154 = por %p152, %p153
      %p156 = scmp.ne.s32.totalorder %s139, %s155
      %p157 = scmp.eq.s32.totalorder %s21, 0
      %p158 = por %p156, %p157
      %p159 = scmp.le.s32.totalorder 1, %s15
      %p160 = scmp.lt.s32.totalorder %s15, 3
      %p161 = pnand %p159, %p160
      %p162 = pneg %p161
      // Predicated region
      $region9: #{tpu_custom_call.1} parent=5 // pred_check
        _
      $region10: #{tpu_custom_call.1} parent=5 // pred_check_branch
        %164 = sbr.rel (%p161) target = $region12
      $region11: #{tpu_custom_call.1} parent=5 // pred_region
        %s165 = ssub.s32 %s15, 1
        // Predicated region
        $region13: #{tpu_custom_call.1} parent=11 // pred_check
          %p166 = pneg %p62
        $region14: #{tpu_custom_call.1} parent=11 // pred_check_branch
          %168 = sbr.rel (%p166) target = $region16
        $region15: #{tpu_custom_call.1} parent=11 // pred_region
          %s170 = ssub.s32 6144, 6144
          %171 = vsyncadd [#allocation3], %s170
          %s172 = sshll.u32 [#allocation2], 4
          %s173 = int_to_ptr.vmem [resolvable:$true] %s172
          %178 = dma.hbm_to_vmem [thread:$0]  %s1, 6144, %s173, [#allocation3], 128, 128, 8
        $region16: #{tpu_custom_call.1} parent=11 // pred_fallthru
          _
        // Predicated region
        $region17: #{tpu_custom_call.1} parent=11 // pred_check
          %p179 = pneg %p83
        $region18: #{tpu_custom_call.1} parent=11 // pred_check_branch
          %181 = sbr.rel (%p179) target = $region20
        $region19: #{tpu_custom_call.1} parent=11 // pred_region
          _
        $region20: #{tpu_custom_call.1} parent=11 // pred_fallthru
          _
        // Predicated region
        $region21: #{tpu_custom_call.1} parent=11 // pred_check
          %p182 = pneg %p104
        $region22: #{tpu_custom_call.1} parent=11 // pred_check_branch
          %184 = sbr.rel (%p182) target = $region24
        $region23: #{tpu_custom_call.1} parent=11 // pred_region
          _
        $region24: #{tpu_custom_call.1} parent=11 // pred_fallthru
          _
        // Predicated region
        $region25: #{tpu_custom_call.1} parent=11 // pred_check
          %p185 = pneg %p125
        $region26: #{tpu_custom_call.1} parent=11 // pred_check_branch
          %187 = sbr.rel (%p185) target = $region28
        $region27: #{tpu_custom_call.1} parent=11 // pred_region
          _
        $region28: #{tpu_custom_call.1} parent=11 // pred_fallthru
          _
      $region12: #{tpu_custom_call.1} parent=5 // pred_fallthru
        _
      %p188 = scmp.lt.s32.totalorder %s15, 2
      // Predicated region
      $region29: #{tpu_custom_call.1} parent=5 // pred_check
        %p189 = pneg %p188
      $region30: #{tpu_custom_call.1} parent=5 // pred_check_branch
        %191 = sbr.rel (%p189) target = $region32
      $region31: #{tpu_custom_call.1} parent=5 // pred_region
        // Predicated region
        $region33: #{tpu_custom_call.1} parent=31 // pred_check
          %p192 = pneg %p35
        $region34: #{tpu_custom_call.1} parent=31 // pred_check_branch
          %194 = sbr.rel (%p192) target = $region36
        $region35: #{tpu_custom_call.1} parent=31 // pred_region
          %s195 = smul.u32 2, %s15
          %p196 = scmp.lt.s32.totalorder %s195, 3
          %s197 = scalar_select %p196, %s195, 3
          %s198 = smul.addr %s197, 4
          %s199 = scalar_lea.vmem %s0, %s198
          %s200 = smul.u32 2, %s15
        $region36: #{tpu_custom_call.1} parent=31 // pred_fallthru
          _
      $region32: #{tpu_custom_call.1} parent=5 // pred_fallthru
        _
      %p201 = scmp.le.s32.totalorder 1, %s15
      %p202 = scmp.lt.s32.totalorder %s15, 3
      %p203 = pnand %p201, %p202
      %p204 = pneg %p203
      // Predicated region
      $region37: #{tpu_custom_call.1} parent=5 // pred_check
        _
      $region38: #{tpu_custom_call.1} parent=5 // pred_check_branch
        %206 = sbr.rel (%p203) target = $region40
      $region39: #{tpu_custom_call.1} parent=5 // pred_region
        %s207 = ssub.s32 %s15, 1
        // Predicated region
        $region41: #{tpu_custom_call.1} parent=39 // pred_check
          %p208 = pneg %p62
        $region42: #{tpu_custom_call.1} parent=39 // pred_check_branch
          %210 = sbr.rel (%p208) target = $region44
        $region43: #{tpu_custom_call.1} parent=39 // pred_region
          %211 = dma.done [#allocation3], 6144
        $region44: #{tpu_custom_call.1} parent=39 // pred_fallthru
          _
        %s212 = smul.u32 2, %s20
        %p213 = scmp.lt.s32.totalorder %s212, 3
        %s214 = scalar_select %p213, %s212, 3
        %s215 = smul.addr %s214, 4
        %s216 = scalar_lea.vmem %s0, %s215
        %p217 = pneg %p41
        %p218 = pneg %p38
        %p219 = pneg %p62
        %p220 = pneg %p59
        %p221 = pneg %p83
        %p222 = pneg %p80
        %p223 = pneg %p104
        %p224 = pneg %p101
        %p225 = pneg %p125
        %p226 = pneg %p122
        %p227 = pneg %p151
        %p228 = pneg %p148
        %s229 = sand.u32 %s138, 1
        %s230 = scalar_lea.sflag [#allocation4], %s229
        %s231 = sand.u32 %s138, 1
        %s232 = smul.addr %s231, 16
        %s233 = scalar_lea.vmem [#allocation5], %s232
        %s234 = smul.u32 2, %s20
        %p235 = scmp.lt.s32.totalorder %s234, 3
        %s236 = scalar_select %p235, %s234, 3
        %s237 = smul.addr %s236, 4
        %s238 = scalar_lea.vmem %s0, %s237
        %s239 = smul.u32 2, %s20
        %s240 = smul.u32 2, %s20
        %v241 = vld [vmem:[%s238] sm:$0xff]
        %v242 = vld [vmem:[%s2] sm:$0xff]
        %v243 = vld [vmem:[%s2 + $0x8] sm:$0xff]
        %v244 = vld [vmem:[%s2 + $0x10] sm:$0xff]
        %v246 = vcombine.high %v241, %v241
        %vm247 = vcmask 31744
        %v249 = vsel %vm247, %v242, 0
        %v252 = vsel %vm247, %v243, 0
        %v255 = vsel %vm247, %v244, 0
        %vm257 = vcmask 1043456
        %v258 = vsel %vm257, %v241, 0
        %v260 = vsel %vm257, %v246, 0
        %262 = vmatprep.subr.mxu0 0.0
        %263 = vmatpush1.msra.mxu0 0.0
        %264 = vmatprep.subr.mxu0 0.0
        %265 = vmatpush1.msra.mxu0 0.0
        %266 = vmatprep.subr.mxu0 0.0
        %267 = vmatpush1.msra.mxu0 0.0
        %268 = vmatprep.subr.mxu0 0.0
        %269 = vmatpush1.msra.mxu0 0.0
        %270 = vmatprep.subr.mxu0 0.0
        %271 = vmatpush1.msra.mxu0 0.0
        %272 = vmatprep.subr.mxu0 0.0
        %273 = vmatpush1.msra.mxu0 0.0
        %274 = vmatprep.subr.mxu0 0.0
        %275 = vmatpush1.msra.mxu0 0.0
        %276 = vmatprep.subr.mxu0 0.0
        %277 = vmatpush1.msra.mxu0 0.0
        %278 = vmatprep.subr.mxu0 0.0
        %279 = vmatpush1.msra.mxu0 0.0
        %280 = vmatprep.subr.mxu0 0.0
        %281 = vmatpush1.msra.mxu0 0.0
        %282 = vmatprep.subr.mxu0 0.0
        %283 = vmatpush1.msra.mxu0 0.0
        %284 = vmatprep.subr.mxu0 0.0
        %285 = vmatpush1.msra.mxu0 0.0
        %286 = vmatprep.subr.mxu0 0.0
        %287 = vmatpush1.msra.mxu0 0.0
        %288 = vmatprep.subr.mxu0 0.0
        %289 = vmatpush1.msra.mxu0 0.0
        %290 = vmatprep.subr.mxu0 0.0
        %291 = vmatpush1.msra.mxu0 0.0
        %292 = vmatprep.subr.mxu0 %v260
        %293 = vmatpush1.msra.mxu0 %v258
        %294 = vmatprep.subr.mxu0 0.0
        %295 = vmatpush2.msra.mxu0 0.0
        %296 = vmatprep.subr.mxu0 0.0
        %297 = vmatpush2.msra.mxu0 0.0
        %298 = vmatprep.subr.mxu0 0.0
        %299 = vmatpush2.msra.mxu0 0.0
        %300 = vmatprep.subr.mxu0 0.0
        %301 = vmatpush2.msra.mxu0 0.0
        %302 = vmatprep.subr.mxu0 0.0
        %303 = vmatpush2.msra.mxu0 0.0
        %304 = vmatprep.subr.mxu0 0.0
        %305 = vmatpush2.msra.mxu0 0.0
        %306 = vmatprep.subr.mxu0 0.0
        %307 = vmatpush2.msra.mxu0 0.0
        %308 = vmatprep.subr.mxu0 0.0
        %309 = vmatpush2.msra.mxu0 0.0
        %310 = vmatprep.subr.mxu0 0.0
        %311 = vmatpush2.msra.mxu0 0.0
        %312 = vmatprep.subr.mxu0 0.0
        %313 = vmatpush2.msra.mxu0 0.0
        %314 = vmatprep.subr.mxu0 0.0
        %315 = vmatpush2.msra.mxu0 0.0
        %316 = vmatprep.subr.mxu0 0.0
        %317 = vmatpush2.msra.mxu0 0.0
        %318 = vmatprep.subr.mxu0 0.0
        %319 = vmatpush2.msra.mxu0 0.0
        %320 = vmatprep.subr.mxu0 0.0
        %321 = vmatpush2.msra.mxu0 0.0
        %322 = vmatprep.subr.mxu0 0.0
        %323 = vmatpush2.msra.mxu0 0.0
        %324 = vmatprep.subr.mxu0 0.0
        %325 = vmatpush2.msra.mxu0 0.0
        %326 = vmatprep.mubr.f32.mxu0 0.0
        %327 = vmatmul.mubr.f32.gmra.mxu0 %v249
        %v328 = vpop.f32.mrf.mxu0
        %v329 = vadd.f32 0.0, %v328
        %v330 = vpop.f32.mrf.mxu0
        %v331 = vadd.f32 0.0, %v330
        %332 = vmatprep.mubr.f32.mxu0 0.0
        %333 = vmatmul.mubr.f32.gmra.mxu0 %v252
        %v334 = vpop.f32.mrf.mxu0
        %v335 = vadd.f32 0.0, %v334
        %v336 = vpop.f32.mrf.mxu0
        %v337 = vadd.f32 0.0, %v336
        %338 = vmatprep.mubr.f32.mxu0 0.0
        %339 = vmatmul.mubr.f32.gmra.mxu0 %v255
        %v340 = vpop.f32.mrf.mxu0
        %v341 = vadd.f32 0.0, %v340
        %v342 = vpop.f32.mrf.mxu0
        %v343 = vadd.f32 0.0, %v342
        %344 = vdwg.mxu0
        %v345 = vld [vmem:[#allocation2] sm:$0xff]
        %v346 = vld [vmem:[#allocation2 + $0x8] sm:$0xff]
        %v347 = vld [vmem:[#allocation2 + $0x10] sm:$0xff]
        %v348 = vld [vmem:[#allocation2 + $0x18] sm:$0xff]
        %v349 = vld [vmem:[#allocation2 + $0x20] sm:$0xff]
        %v350 = vld [vmem:[#allocation2 + $0x28] sm:$0xff]
        %v351 = vld [vmem:[#allocation2 + $0x30] sm:$0xff]
        %v352 = vld [vmem:[#allocation2 + $0x38] sm:$0xff]
        %v353 = vld [vmem:[#allocation2 + $0x40] sm:$0xff]
        %v354 = vld [vmem:[#allocation2 + $0x48] sm:$0xff]
        %v355 = vld [vmem:[#allocation2 + $0x50] sm:$0xff]
        %v356 = vld [vmem:[#allocation2 + $0x58] sm:$0xff]
        %v357 = vld [vmem:[#allocation2 + $0x60] sm:$0xff]
        %v358 = vld [vmem:[#allocation2 + $0x68] sm:$0xff]
        %v359 = vld [vmem:[#allocation2 + $0x70] sm:$0xff]
        %v360 = vld [vmem:[#allocation2 + $0x78] sm:$0xff]
        %s361 = scalar_lea.vmem [#allocation2], 128
        %v362 = vld [vmem:[%s361] sm:$0xff]
        %v363 = vld [vmem:[%s361 + $0x8] sm:$0xff]
        %v364 = vld [vmem:[%s361 + $0x10] sm:$0xff]
        %v365 = vld [vmem:[%s361 + $0x18] sm:$0xff]
        %v366 = vld [vmem:[%s361 + $0x20] sm:$0xff]
        %v367 = vld [vmem:[%s361 + $0x28] sm:$0xff]
        %v368 = vld [vmem:[%s361 + $0x30] sm:$0xff]
        %v369 = vld [vmem:[%s361 + $0x38] sm:$0xff]
        %v370 = vld [vmem:[%s361 + $0x40] sm:$0xff]
        %v371 = vld [vmem:[%s361 + $0x48] sm:$0xff]
        %v372 = vld [vmem:[%s361 + $0x50] sm:$0xff]
        %v373 = vld [vmem:[%s361 + $0x58] sm:$0xff]
        %v374 = vld [vmem:[%s361 + $0x60] sm:$0xff]
        %v375 = vld [vmem:[%s361 + $0x68] sm:$0xff]
        %v376 = vld [vmem:[%s361 + $0x70] sm:$0xff]
        %v377 = vld [vmem:[%s361 + $0x78] sm:$0xff]
        %378 = vmatprep.subr.mxu0 0.0
        %379 = vmatpush1.msra.mxu0 %v377
        %380 = vmatprep.subr.mxu0 0.0
        %381 = vmatpush1.msra.mxu0 %v376
        %382 = vmatprep.subr.mxu0 0.0
        %383 = vmatpush1.msra.mxu0 %v375
        %384 = vmatprep.subr.mxu0 0.0
        %385 = vmatpush1.msra.mxu0 %v374
        %386 = vmatprep.subr.mxu0 0.0
        %387 = vmatpush1.msra.mxu0 %v373
        %388 = vmatprep.subr.mxu0 0.0
        %389 = vmatpush1.msra.mxu0 %v372
        %390 = vmatprep.subr.mxu0 0.0
        %391 = vmatpush1.msra.mxu0 %v371
        %392 = vmatprep.subr.mxu0 0.0
        %393 = vmatpush1.msra.mxu0 %v370
        %394 = vmatprep.subr.mxu0 0.0
        %395 = vmatpush1.msra.mxu0 %v369
        %396 = vmatprep.subr.mxu0 0.0
        %397 = vmatpush1.msra.mxu0 %v368
        %398 = vmatprep.subr.mxu0 0.0
        %399 = vmatpush1.msra.mxu0 %v367
        %400 = vmatprep.subr.mxu0 0.0
        %401 = vmatpush1.msra.mxu0 %v366
        %402 = vmatprep.subr.mxu0 0.0
        %403 = vmatpush1.msra.mxu0 %v365
        %404 = vmatprep.subr.mxu0 0.0
        %405 = vmatpush1.msra.mxu0 %v364
        %406 = vmatprep.subr.mxu0 0.0
        %407 = vmatpush1.msra.mxu0 %v363
        %408 = vmatprep.subr.mxu0 0.0
        %409 = vmatpush1.msra.mxu0 %v362
        %410 = vmatprep.subr.mxu0 0.0
        %411 = vmatpush2.msra.mxu0 0.0
        %412 = vmatprep.subr.mxu0 0.0
        %413 = vmatpush2.msra.mxu0 0.0
        %414 = vmatprep.subr.mxu0 0.0
        %415 = vmatpush2.msra.mxu0 0.0
        %416 = vmatprep.subr.mxu0 0.0
        %417 = vmatpush2.msra.mxu0 0.0
        %418 = vmatprep.subr.mxu0 0.0
        %419 = vmatpush2.msra.mxu0 0.0
        %420 = vmatprep.subr.mxu0 0.0
        %421 = vmatpush2.msra.mxu0 0.0
        %422 = vmatprep.subr.mxu0 0.0
        %423 = vmatpush2.msra.mxu0 0.0
        %424 = vmatprep.subr.mxu0 0.0
        %425 = vmatpush2.msra.mxu0 0.0
        %426 = vmatprep.subr.mxu0 0.0
        %427 = vmatpush2.msra.mxu0 0.0
        %428 = vmatprep.subr.mxu0 0.0
        %429 = vmatpush2.msra.mxu0 0.0
        %430 = vmatprep.subr.mxu0 0.0
        %431 = vmatpush2.msra.mxu0 0.0
        %432 = vmatprep.subr.mxu0 0.0
        %433 = vmatpush2.msra.mxu0 0.0
        %434 = vmatprep.subr.mxu0 0.0
        %435 = vmatpush2.msra.mxu0 0.0
        %436 = vmatprep.subr.mxu0 0.0
        %437 = vmatpush2.msra.mxu0 0.0
        %438 = vmatprep.subr.mxu0 0.0
        %439 = vmatpush2.msra.mxu0 0.0
        %440 = vmatprep.subr.mxu0 0.0
        %441 = vmatpush2.msra.mxu0 0.0
        %442 = vmatprep.mubr.f32.mxu0 0.0
        %443 = vmatmul.mubr.f32.gmra.mxu0 %v335
        %v444 = vpop.f32.mrf.mxu0
        %v445 = vadd.f32 0.0, %v444
        %v446 = vpop.f32.mrf.mxu0
        %447 = vdwg.mxu0
        %448 = vmatprep.subr.mxu0 0.0
        %449 = vmatpush1.msra.mxu0 %v360
        %450 = vmatprep.subr.mxu0 0.0
        %451 = vmatpush1.msra.mxu0 %v359
        %452 = vmatprep.subr.mxu0 0.0
        %453 = vmatpush1.msra.mxu0 %v358
        %454 = vmatprep.subr.mxu0 0.0
        %455 = vmatpush1.msra.mxu0 %v357
        %456 = vmatprep.subr.mxu0 0.0
        %457 = vmatpush1.msra.mxu0 %v356
        %458 = vmatprep.subr.mxu0 0.0
        %459 = vmatpush1.msra.mxu0 %v355
        %460 = vmatprep.subr.mxu0 0.0
        %461 = vmatpush1.msra.mxu0 %v354
        %462 = vmatprep.subr.mxu0 0.0
        %463 = vmatpush1.msra.mxu0 %v353
        %464 = vmatprep.subr.mxu0 0.0
        %465 = vmatpush1.msra.mxu0 %v352
        %466 = vmatprep.subr.mxu0 0.0
        %467 = vmatpush1.msra.mxu0 %v351
        %468 = vmatprep.subr.mxu0 0.0
        %469 = vmatpush1.msra.mxu0 %v350
        %470 = vmatprep.subr.mxu0 0.0
        %471 = vmatpush1.msra.mxu0 %v349
        %472 = vmatprep.subr.mxu0 0.0
        %473 = vmatpush1.msra.mxu0 %v348
        %474 = vmatprep.subr.mxu0 0.0
        %475 = vmatpush1.msra.mxu0 %v347
        %476 = vmatprep.subr.mxu0 0.0
        %477 = vmatpush1.msra.mxu0 %v346
        %478 = vmatprep.subr.mxu0 0.0
        %479 = vmatpush1.msra.mxu0 %v345
        %480 = vmatprep.subr.mxu0 0.0
        %481 = vmatpush2.msra.mxu0 0.0
        %482 = vmatprep.subr.mxu0 0.0
        %483 = vmatpush2.msra.mxu0 0.0
        %484 = vmatprep.subr.mxu0 0.0
        %485 = vmatpush2.msra.mxu0 0.0
        %486 = vmatprep.subr.mxu0 0.0
        %487 = vmatpush2.msra.mxu0 0.0
        %488 = vmatprep.subr.mxu0 0.0
        %489 = vmatpush2.msra.mxu0 0.0
        %490 = vmatprep.subr.mxu0 0.0
        %491 = vmatpush2.msra.mxu0 0.0
        %492 = vmatprep.subr.mxu0 0.0
        %493 = vmatpush2.msra.mxu0 0.0
        %494 = vmatprep.subr.mxu0 0.0
        %495 = vmatpush2.msra.mxu0 0.0
        %496 = vmatprep.subr.mxu0 0.0
        %497 = vmatpush2.msra.mxu0 0.0
        %498 = vmatprep.subr.mxu0 0.0
        %499 = vmatpush2.msra.mxu0 0.0
        %500 = vmatprep.subr.mxu0 0.0
        %501 = vmatpush2.msra.mxu0 0.0
        %502 = vmatprep.subr.mxu0 0.0
        %503 = vmatpush2.msra.mxu0 0.0
        %504 = vmatprep.subr.mxu0 0.0
        %505 = vmatpush2.msra.mxu0 0.0
        %506 = vmatprep.subr.mxu0 0.0
        %507 = vmatpush2.msra.mxu0 0.0
        %508 = vmatprep.subr.mxu0 0.0
        %509 = vmatpush2.msra.mxu0 0.0
        %510 = vmatprep.subr.mxu0 0.0
        %511 = vmatpush2.msra.mxu0 0.0
        %512 = vmatprep.mubr.f32.mxu0 0.0
        %513 = vmatmul.mubr.f32.gmra.mxu0 %v329
        %v514 = vpop.f32.mrf.mxu0
        %v515 = vadd.f32 %v445, %v514
        %v516 = vpop.f32.mrf.mxu0
        %517 = vdwg.mxu0
        %s518 = scalar_lea.vmem [#allocation2], 256
        %v519 = vld [vmem:[%s518] sm:$0xff]
        %v520 = vld [vmem:[%s518 + $0x8] sm:$0xff]
        %v521 = vld [vmem:[%s518 + $0x10] sm:$0xff]
        %v522 = vld [vmem:[%s518 + $0x18] sm:$0xff]
        %v523 = vld [vmem:[%s518 + $0x20] sm:$0xff]
        %v524 = vld [vmem:[%s518 + $0x28] sm:$0xff]
        %v525 = vld [vmem:[%s518 + $0x30] sm:$0xff]
        %v526 = vld [vmem:[%s518 + $0x38] sm:$0xff]
        %v527 = vld [vmem:[%s518 + $0x40] sm:$0xff]
        %v528 = vld [vmem:[%s518 + $0x48] sm:$0xff]
        %v529 = vld [vmem:[%s518 + $0x50] sm:$0xff]
        %v530 = vld [vmem:[%s518 + $0x58] sm:$0xff]
        %v531 = vld [vmem:[%s518 + $0x60] sm:$0xff]
        %v532 = vld [vmem:[%s518 + $0x68] sm:$0xff]
        %v533 = vld [vmem:[%s518 + $0x70] sm:$0xff]
        %v534 = vld [vmem:[%s518 + $0x78] sm:$0xff]
        %535 = vmatprep.subr.mxu0 0.0
        %536 = vmatpush1.msra.mxu0 %v534
        %537 = vmatprep.subr.mxu0 0.0
        %538 = vmatpush1.msra.mxu0 %v533
        %539 = vmatprep.subr.mxu0 0.0
        %540 = vmatpush1.msra.mxu0 %v532
        %541 = vmatprep.subr.mxu0 0.0
        %542 = vmatpush1.msra.mxu0 %v531
        %543 = vmatprep.subr.mxu0 0.0
        %544 = vmatpush1.msra.mxu0 %v530
        %545 = vmatprep.subr.mxu0 0.0
        %546 = vmatpush1.msra.mxu0 %v529
        %547 = vmatprep.subr.mxu0 0.0
        %548 = vmatpush1.msra.mxu0 %v528
        %549 = vmatprep.subr.mxu0 0.0
        %550 = vmatpush1.msra.mxu0 %v527
        %551 = vmatprep.subr.mxu0 0.0
        %552 = vmatpush1.msra.mxu0 %v526
        %553 = vmatprep.subr.mxu0 0.0
        %554 = vmatpush1.msra.mxu0 %v525
        %555 = vmatprep.subr.mxu0 0.0
        %556 = vmatpush1.msra.mxu0 %v524
        %557 = vmatprep.subr.mxu0 0.0
        %558 = vmatpush1.msra.mxu0 %v523
        %559 = vmatprep.subr.mxu0 0.0
        %560 = vmatpush1.msra.mxu0 %v522
        %561 = vmatprep.subr.mxu0 0.0
        %562 = vmatpush1.msra.mxu0 %v521
        %563 = vmatprep.subr.mxu0 0.0
        %564 = vmatpush1.msra.mxu0 %v520
        %565 = vmatprep.subr.mxu0 0.0
        %566 = vmatpush1.msra.mxu0 %v519
        %567 = vmatprep.subr.mxu0 0.0
        %568 = vmatpush2.msra.mxu0 0.0
        %569 = vmatprep.subr.mxu0 0.0
        %570 = vmatpush2.msra.mxu0 0.0
        %571 = vmatprep.subr.mxu0 0.0
        %572 = vmatpush2.msra.mxu0 0.0
        %573 = vmatprep.subr.mxu0 0.0
        %574 = vmatpush2.msra.mxu0 0.0
        %575 = vmatprep.subr.mxu0 0.0
        %576 = vmatpush2.msra.mxu0 0.0
        %577 = vmatprep.subr.mxu0 0.0
        %578 = vmatpush2.msra.mxu0 0.0
        %579 = vmatprep.subr.mxu0 0.0
        %580 = vmatpush2.msra.mxu0 0.0
        %581 = vmatprep.subr.mxu0 0.0
        %582 = vmatpush2.msra.mxu0 0.0
        %583 = vmatprep.subr.mxu0 0.0
        %584 = vmatpush2.msra.mxu0 0.0
        %585 = vmatprep.subr.mxu0 0.0
        %586 = vmatpush2.msra.mxu0 0.0
        %587 = vmatprep.subr.mxu0 0.0
        %588 = vmatpush2.msra.mxu0 0.0
        %589 = vmatprep.subr.mxu0 0.0
        %590 = vmatpush2.msra.mxu0 0.0
        %591 = vmatprep.subr.mxu0 0.0
        %592 = vmatpush2.msra.mxu0 0.0
        %593 = vmatprep.subr.mxu0 0.0
        %594 = vmatpush2.msra.mxu0 0.0
        %595 = vmatprep.subr.mxu0 0.0
        %596 = vmatpush2.msra.mxu0 0.0
        %597 = vmatprep.subr.mxu0 0.0
        %598 = vmatpush2.msra.mxu0 0.0
        %599 = vmatprep.mubr.f32.mxu0 0.0
        %600 = vmatmul.mubr.f32.gmra.mxu0 %v341
        %v601 = vpop.f32.mrf.mxu0
        %v602 = vadd.f32 0.0, %v601
        %v603 = vpop.f32.mrf.mxu0
        %604 = vdwg.mxu0
        %v605 = vadd.f32 %v515, %v602
        %606 = vmatprep.subr.mxu0 0.0
        %607 = vmatpush1.msra.mxu0 %v377
        %608 = vmatprep.subr.mxu0 0.0
        %609 = vmatpush1.msra.mxu0 %v376
        %610 = vmatprep.subr.mxu0 0.0
        %611 = vmatpush1.msra.mxu0 %v375
        %612 = vmatprep.subr.mxu0 0.0
        %613 = vmatpush1.msra.mxu0 %v374
        %614 = vmatprep.subr.mxu0 0.0
        %615 = vmatpush1.msra.mxu0 %v373
        %616 = vmatprep.subr.mxu0 0.0
        %617 = vmatpush1.msra.mxu0 %v372
        %618 = vmatprep.subr.mxu0 0.0
        %619 = vmatpush1.msra.mxu0 %v371
        %620 = vmatprep.subr.mxu0 0.0
        %621 = vmatpush1.msra.mxu0 %v370
        %622 = vmatprep.subr.mxu0 0.0
        %623 = vmatpush1.msra.mxu0 %v369
        %624 = vmatprep.subr.mxu0 0.0
        %625 = vmatpush1.msra.mxu0 %v368
        %626 = vmatprep.subr.mxu0 0.0
        %627 = vmatpush1.msra.mxu0 %v367
        %628 = vmatprep.subr.mxu0 0.0
        %629 = vmatpush1.msra.mxu0 %v366
        %630 = vmatprep.subr.mxu0 0.0
        %631 = vmatpush1.msra.mxu0 %v365
        %632 = vmatprep.subr.mxu0 0.0
        %633 = vmatpush1.msra.mxu0 %v364
        %634 = vmatprep.subr.mxu0 0.0
        %635 = vmatpush1.msra.mxu0 %v363
        %636 = vmatprep.subr.mxu0 0.0
        %637 = vmatpush1.msra.mxu0 %v362
        %638 = vmatprep.subr.mxu0 0.0
        %639 = vmatpush2.msra.mxu0 0.0
        %640 = vmatprep.subr.mxu0 0.0
        %641 = vmatpush2.msra.mxu0 0.0
        %642 = vmatprep.subr.mxu0 0.0
        %643 = vmatpush2.msra.mxu0 0.0
        %644 = vmatprep.subr.mxu0 0.0
        %645 = vmatpush2.msra.mxu0 0.0
        %646 = vmatprep.subr.mxu0 0.0
        %647 = vmatpush2.msra.mxu0 0.0
        %648 = vmatprep.subr.mxu0 0.0
        %649 = vmatpush2.msra.mxu0 0.0
        %650 = vmatprep.subr.mxu0 0.0
        %651 = vmatpush2.msra.mxu0 0.0
        %652 = vmatprep.subr.mxu0 0.0
        %653 = vmatpush2.msra.mxu0 0.0
        %654 = vmatprep.subr.mxu0 0.0
        %655 = vmatpush2.msra.mxu0 0.0
        %656 = vmatprep.subr.mxu0 0.0
        %657 = vmatpush2.msra.mxu0 0.0
        %658 = vmatprep.subr.mxu0 0.0
        %659 = vmatpush2.msra.mxu0 0.0
        %660 = vmatprep.subr.mxu0 0.0
        %661 = vmatpush2.msra.mxu0 0.0
        %662 = vmatprep.subr.mxu0 0.0
        %663 = vmatpush2.msra.mxu0 0.0
        %664 = vmatprep.subr.mxu0 0.0
        %665 = vmatpush2.msra.mxu0 0.0
        %666 = vmatprep.subr.mxu0 0.0
        %667 = vmatpush2.msra.mxu0 0.0
        %668 = vmatprep.subr.mxu0 0.0
        %669 = vmatpush2.msra.mxu0 0.0
        %670 = vmatprep.mubr.f32.mxu0 0.0
        %671 = vmatmul.mubr.f32.gmra.mxu0 %v337
        %v672 = vpop.f32.mrf.mxu0
        %v673 = vadd.f32 0.0, %v672
        %v674 = vpop.f32.mrf.mxu0
        %675 = vdwg.mxu0
        %676 = vmatprep.subr.mxu0 0.0
        %677 = vmatpush1.msra.mxu0 %v360
        %678 = vmatprep.subr.mxu0 0.0
        %679 = vmatpush1.msra.mxu0 %v359
        %680 = vmatprep.subr.mxu0 0.0
        %681 = vmatpush1.msra.mxu0 %v358
        %682 = vmatprep.subr.mxu0 0.0
        %683 = vmatpush1.msra.mxu0 %v357
        %684 = vmatprep.subr.mxu0 0.0
        %685 = vmatpush1.msra.mxu0 %v356
        %686 = vmatprep.subr.mxu0 0.0
        %687 = vmatpush1.msra.mxu0 %v355
        %688 = vmatprep.subr.mxu0 0.0
        %689 = vmatpush1.msra.mxu0 %v354
        %690 = vmatprep.subr.mxu0 0.0
        %691 = vmatpush1.msra.mxu0 %v353
        %692 = vmatprep.subr.mxu0 0.0
        %693 = vmatpush1.msra.mxu0 %v352
        %694 = vmatprep.subr.mxu0 0.0
        %695 = vmatpush1.msra.mxu0 %v351
        %696 = vmatprep.subr.mxu0 0.0
        %697 = vmatpush1.msra.mxu0 %v350
        %698 = vmatprep.subr.mxu0 0.0
        %699 = vmatpush1.msra.mxu0 %v349
        %700 = vmatprep.subr.mxu0 0.0
        %701 = vmatpush1.msra.mxu0 %v348
        %702 = vmatprep.subr.mxu0 0.0
        %703 = vmatpush1.msra.mxu0 %v347
        %704 = vmatprep.subr.mxu0 0.0
        %705 = vmatpush1.msra.mxu0 %v346
        %706 = vmatprep.subr.mxu0 0.0
        %707 = vmatpush1.msra.mxu0 %v345
        %708 = vmatprep.subr.mxu0 0.0
        %709 = vmatpush2.msra.mxu0 0.0
        %710 = vmatprep.subr.mxu0 0.0
        %711 = vmatpush2.msra.mxu0 0.0
        %712 = vmatprep.subr.mxu0 0.0
        %713 = vmatpush2.msra.mxu0 0.0
        %714 = vmatprep.subr.mxu0 0.0
        %715 = vmatpush2.msra.mxu0 0.0
        %716 = vmatprep.subr.mxu0 0.0
        %717 = vmatpush2.msra.mxu0 0.0
        %718 = vmatprep.subr.mxu0 0.0
        %719 = vmatpush2.msra.mxu0 0.0
        %720 = vmatprep.subr.mxu0 0.0
        %721 = vmatpush2.msra.mxu0 0.0
        %722 = vmatprep.subr.mxu0 0.0
        %723 = vmatpush2.msra.mxu0 0.0
        %724 = vmatprep.subr.mxu0 0.0
        %725 = vmatpush2.msra.mxu0 0.0
        %726 = vmatprep.subr.mxu0 0.0
        %727 = vmatpush2.msra.mxu0 0.0
        %728 = vmatprep.subr.mxu0 0.0
        %729 = vmatpush2.msra.mxu0 0.0
        %730 = vmatprep.subr.mxu0 0.0
        %731 = vmatpush2.msra.mxu0 0.0
        %732 = vmatprep.subr.mxu0 0.0
        %733 = vmatpush2.msra.mxu0 0.0
        %734 = vmatprep.subr.mxu0 0.0
        %735 = vmatpush2.msra.mxu0 0.0
        %736 = vmatprep.subr.mxu0 0.0
        %737 = vmatpush2.msra.mxu0 0.0
        %738 = vmatprep.subr.mxu0 0.0
        %739 = vmatpush2.msra.mxu0 0.0
        %740 = vmatprep.mubr.f32.mxu0 0.0
        %741 = vmatmul.mubr.f32.gmra.mxu0 %v331
        %v742 = vpop.f32.mrf.mxu0
        %v743 = vadd.f32 %v673, %v742
        %v744 = vpop.f32.mrf.mxu0
        %745 = vdwg.mxu0
        %746 = vmatprep.subr.mxu0 0.0
        %747 = vmatpush1.msra.mxu0 %v534
        %748 = vmatprep.subr.mxu0 0.0
        %749 = vmatpush1.msra.mxu0 %v533
        %750 = vmatprep.subr.mxu0 0.0
        %751 = vmatpush1.msra.mxu0 %v532
        %752 = vmatprep.subr.mxu0 0.0
        %753 = vmatpush1.msra.mxu0 %v531
        %754 = vmatprep.subr.mxu0 0.0
        %755 = vmatpush1.msra.mxu0 %v530
        %756 = vmatprep.subr.mxu0 0.0
        %757 = vmatpush1.msra.mxu0 %v529
        %758 = vmatprep.subr.mxu0 0.0
        %759 = vmatpush1.msra.mxu0 %v528
        %760 = vmatprep.subr.mxu0 0.0
        %761 = vmatpush1.msra.mxu0 %v527
        %762 = vmatprep.subr.mxu0 0.0
        %763 = vmatpush1.msra.mxu0 %v526
        %764 = vmatprep.subr.mxu0 0.0
        %765 = vmatpush1.msra.mxu0 %v525
        %766 = vmatprep.subr.mxu0 0.0
        %767 = vmatpush1.msra.mxu0 %v524
        %768 = vmatprep.subr.mxu0 0.0
        %769 = vmatpush1.msra.mxu0 %v523
        %770 = vmatprep.subr.mxu0 0.0
        %771 = vmatpush1.msra.mxu0 %v522
        %772 = vmatprep.subr.mxu0 0.0
        %773 = vmatpush1.msra.mxu0 %v521
        %774 = vmatprep.subr.mxu0 0.0
        %775 = vmatpush1.msra.mxu0 %v520
        %776 = vmatprep.subr.mxu0 0.0
        %777 = vmatpush1.msra.mxu0 %v519
        %778 = vmatprep.subr.mxu0 0.0
        %779 = vmatpush2.msra.mxu0 0.0
        %780 = vmatprep.subr.mxu0 0.0
        %781 = vmatpush2.msra.mxu0 0.0
        %782 = vmatprep.subr.mxu0 0.0
        %783 = vmatpush2.msra.mxu0 0.0
        %784 = vmatprep.subr.mxu0 0.0
        %785 = vmatpush2.msra.mxu0 0.0
        %786 = vmatprep.subr.mxu0 0.0
        %787 = vmatpush2.msra.mxu0 0.0
        %788 = vmatprep.subr.mxu0 0.0
        %789 = vmatpush2.msra.mxu0 0.0
        %790 = vmatprep.subr.mxu0 0.0
        %791 = vmatpush2.msra.mxu0 0.0
        %792 = vmatprep.subr.mxu0 0.0
        %793 = vmatpush2.msra.mxu0 0.0
        %794 = vmatprep.subr.mxu0 0.0
        %795 = vmatpush2.msra.mxu0 0.0
        %796 = vmatprep.subr.mxu0 0.0
        %797 = vmatpush2.msra.mxu0 0.0
        %798 = vmatprep.subr.mxu0 0.0
        %799 = vmatpush2.msra.mxu0 0.0
        %800 = vmatprep.subr.mxu0 0.0
        %801 = vmatpush2.msra.mxu0 0.0
        %802 = vmatprep.subr.mxu0 0.0
        %803 = vmatpush2.msra.mxu0 0.0
        %804 = vmatprep.subr.mxu0 0.0
        %805 = vmatpush2.msra.mxu0 0.0
        %806 = vmatprep.subr.mxu0 0.0
        %807 = vmatpush2.msra.mxu0 0.0
        %808 = vmatprep.subr.mxu0 0.0
        %809 = vmatpush2.msra.mxu0 0.0
        %810 = vmatprep.mubr.f32.mxu0 0.0
        %811 = vmatmul.mubr.f32.gmra.mxu0 %v343
        %v812 = vpop.f32.mrf.mxu0
        %v813 = vadd.f32 0.0, %v812
        %v814 = vpop.f32.mrf.mxu0
        %815 = vdwg.mxu0
        %v816 = vadd.f32 %v743, %v813
        %v817 = vld [vmem:[%s4] sm:$0xff]
        %v818 = vld [vmem:[%s3] sm:$0xff]
        %v820 = vsel %vm247, %v818, 0
        %822 = vmatprep.subr.mxu0 0.0
        %823 = vmatpush1.msra.mxu0 0.0
        %824 = vmatprep.subr.mxu0 0.0
        %825 = vmatpush1.msra.mxu0 0.0
        %826 = vmatprep.subr.mxu0 0.0
        %827 = vmatpush1.msra.mxu0 0.0
        %828 = vmatprep.subr.mxu0 0.0
        %829 = vmatpush1.msra.mxu0 0.0
        %830 = vmatprep.subr.mxu0 0.0
        %831 = vmatpush1.msra.mxu0 0.0
        %832 = vmatprep.subr.mxu0 0.0
        %833 = vmatpush1.msra.mxu0 0.0
        %834 = vmatprep.subr.mxu0 0.0
        %835 = vmatpush1.msra.mxu0 0.0
        %836 = vmatprep.subr.mxu0 0.0
        %837 = vmatpush1.msra.mxu0 0.0
        %838 = vmatprep.subr.mxu0 0.0
        %839 = vmatpush1.msra.mxu0 0.0
        %840 = vmatprep.subr.mxu0 0.0
        %841 = vmatpush1.msra.mxu0 0.0
        %842 = vmatprep.subr.mxu0 0.0
        %843 = vmatpush1.msra.mxu0 0.0
        %844 = vmatprep.subr.mxu0 0.0
        %845 = vmatpush1.msra.mxu0 0.0
        %846 = vmatprep.subr.mxu0 0.0
        %847 = vmatpush1.msra.mxu0 0.0
        %848 = vmatprep.subr.mxu0 0.0
        %849 = vmatpush1.msra.mxu0 0.0
        %850 = vmatprep.subr.mxu0 0.0
        %851 = vmatpush1.msra.mxu0 0.0
        %852 = vmatprep.subr.mxu0 %v260
        %853 = vmatpush1.msra.mxu0 %v258
        %854 = vmatprep.subr.mxu0 0.0
        %855 = vmatpush2.msra.mxu0 0.0
        %856 = vmatprep.subr.mxu0 0.0
        %857 = vmatpush2.msra.mxu0 0.0
        %858 = vmatprep.subr.mxu0 0.0
        %859 = vmatpush2.msra.mxu0 0.0
        %860 = vmatprep.subr.mxu0 0.0
        %861 = vmatpush2.msra.mxu0 0.0
        %862 = vmatprep.subr.mxu0 0.0
        %863 = vmatpush2.msra.mxu0 0.0
        %864 = vmatprep.subr.mxu0 0.0
        %865 = vmatpush2.msra.mxu0 0.0
        %866 = vmatprep.subr.mxu0 0.0
        %867 = vmatpush2.msra.mxu0 0.0
        %868 = vmatprep.subr.mxu0 0.0
        %869 = vmatpush2.msra.mxu0 0.0
        %870 = vmatprep.subr.mxu0 0.0
        %871 = vmatpush2.msra.mxu0 0.0
        %872 = vmatprep.subr.mxu0 0.0
        %873 = vmatpush2.msra.mxu0 0.0
        %874 = vmatprep.subr.mxu0 0.0
        %875 = vmatpush2.msra.mxu0 0.0
        %876 = vmatprep.subr.mxu0 0.0
        %877 = vmatpush2.msra.mxu0 0.0
        %878 = vmatprep.subr.mxu0 0.0
        %879 = vmatpush2.msra.mxu0 0.0
        %880 = vmatprep.subr.mxu0 0.0
        %881 = vmatpush2.msra.mxu0 0.0
        %882 = vmatprep.subr.mxu0 0.0
        %883 = vmatpush2.msra.mxu0 0.0
        %884 = vmatprep.subr.mxu0 0.0
        %885 = vmatpush2.msra.mxu0 0.0
        %886 = vmatprep.mubr.f32.mxu0 0.0
        %887 = vmatmul.mubr.f32.gmra.mxu0 %v820
        %v888 = vpop.f32.mrf.mxu0
        %v889 = vadd.f32 0.0, %v888
        %v890 = vpop.f32.mrf.mxu0
        %v891 = vadd.f32 0.0, %v890
        %892 = vdwg.mxu0
        %v893 = vadd.f32 %v605, %v816
        %894 = vadd.xlane.f32.xlu0 %v893
        %v895 = vpop.xlane.xlu0 %894
        %v896 = vmul.f32 %v895, 0.00390625
        %v897 = vmul.f32 %v605, %v605
        %v898 = vmul.f32 %v816, %v816
        %v899 = vadd.f32 %v897, %v898
        %900 = vadd.xlane.f32.xlu0 %v899
        %v901 = vpop.xlane.xlu0 %900
        %v902 = vmul.f32 %v901, 0.00390625
        %v903 = vmul.f32 %v896, %v896
        %v904 = vsub.f32 %v902, %v903
        %v905 = vsub.f32 %v605, %v896
        %v906 = vsub.f32 %v816, %v896
        %v907 = vadd.f32 %v904, 1e-05
        %v908 = vrsqrt.pop %v907
        %v909 = vmul.f32 %v905, %v908
        %v910 = vmul.f32 %v906, %v908
        %912 = vset.pattern.permute.xlu0 0
        %913 = vperm.xlu0 %912, %v817
        %v914 = vpop.permute.xlu0 %913
        %v916 = vmul.f32 %v909, %v914
        %v917 = vmul.f32 %v910, %v914
        %918 = vset.pattern.permute.xlu0 1
        %919 = vperm.xlu0 %918, %v817
        %v920 = vpop.permute.xlu0 %919
        %v922 = vadd.f32 %v916, %v920
        %v923 = vadd.f32 %v917, %v920
        %v924 = vadd.f32 %v889, %v891
        %925 = vadd.xlane.f32.xlu0 %v924
        %v926 = vpop.xlane.xlu0 %925
        %v927 = vmul.f32 %v926, 0.00390625
        %v928 = vmul.f32 %v889, %v889
        %v929 = vmul.f32 %v891, %v891
        %v930 = vadd.f32 %v928, %v929
        %931 = vadd.xlane.f32.xlu0 %v930
        %v932 = vpop.xlane.xlu0 %931
        %v933 = vmul.f32 %v932, 0.00390625
        %v934 = vmul.f32 %v927, %v927
        %v935 = vsub.f32 %v933, %v934
        %v936 = vsub.f32 %v889, %v927
        %v937 = vsub.f32 %v891, %v927
        %v938 = vadd.f32 %v935, 1e-05
        %v939 = vrsqrt.pop %v938
        %v940 = vmul.f32 %v936, %v939
        %v941 = vmul.f32 %v937, %v939
        %942 = vset.pattern.permute.xlu0 2
        %943 = vperm.xlu0 %942, %v817
        %v944 = vpop.permute.xlu0 %943
        %v946 = vmul.f32 %v940, %v944
        %v947 = vmul.f32 %v941, %v944
        %948 = vset.pattern.permute.xlu0 3
        %949 = vperm.xlu0 %948, %v817
        %v950 = vpop.permute.xlu0 %949
        %v952 = vadd.f32 %v946, %v950
        %v953 = vadd.f32 %v947, %v950
        %v954 = vadd.f32 %v922, %v952
        %v955 = vadd.f32 %v923, %v953
        %v956 = vmax.f32 %v954, 0.0
        %v957 = vmax.f32 %v955, 0.0
        %958 = vst [vmem:[%s233] sm:$0xff] %v956
        %959 = vst [vmem:[%s233 + $0x8] sm:$0xff] %v957
        %s960 = sand.u32 %s138, 1
        %s961 = scalar_lea.sflag [#allocation4], %s960
        %s962 = sand.u32 %s138, 1
        %s963 = smul.addr %s962, 16
        %s964 = scalar_lea.vmem [#allocation5], %s963
        // Predicated region
        $region45: #{tpu_custom_call.1} parent=39 // pred_check
          %p965 = pneg %p148
        $region46: #{tpu_custom_call.1} parent=39 // pred_check_branch
          %967 = sbr.rel (%p965) target = $region48
        $region47: #{tpu_custom_call.1} parent=39 // pred_region
          %s968 = smul.u32 2, %s20
          %s970 = ssub.s32 256, 256
          %971 = vsyncadd %s961, %s970
          %s972 = smul.addr %s968, 128
          %s973 = scalar_lea.hbm %s5, %s972
          %s975 = sshll.u32 %s964, 4
          %s976 = int_to_ptr.vmem [resolvable:$true] %s975
          %978 = dma.vmem_to_hbm [thread:$0]  %s976, 256, %s973, %s961
        $region48: #{tpu_custom_call.1} parent=39 // pred_fallthru
          _
      $region40: #{tpu_custom_call.1} parent=5 // pred_fallthru
        _
      %p979 = scmp.le.s32.totalorder 2, %s15
      // Predicated region
      $region49: #{tpu_custom_call.1} parent=5 // pred_check
        %p980 = pneg %p979
      $region50: #{tpu_custom_call.1} parent=5 // pred_check_branch
        %982 = sbr.rel (%p980) target = $region52
      $region51: #{tpu_custom_call.1} parent=5 // pred_region
        %s983 = ssub.s32 %s15, 2
        // Predicated region
        $region53: #{tpu_custom_call.1} parent=51 // pred_check
          %p984 = pneg %p154
        $region54: #{tpu_custom_call.1} parent=51 // pred_check_branch
          %986 = sbr.rel (%p984) target = $region56
        $region55: #{tpu_custom_call.1} parent=51 // pred_region
          %s987 = sand.u32 %s139, 1
          %s988 = scalar_lea.sflag [#allocation4], %s987
          %s989 = sand.u32 %s139, 1
          %s990 = smul.addr %s989, 16
          %s991 = scalar_lea.vmem [#allocation5], %s990
          %992 = dma.done %s988, 256
        $region56: #{tpu_custom_call.1} parent=51 // pred_fallthru
          _
      $region52: #{tpu_custom_call.1} parent=5 // pred_fallthru
        _
    $region6: #{tpu_custom_call.1} parent=1 // loop_footer
      %s19 = sadd.s32 1, %s15
    $region7: #{tpu_custom_call.1} parent=1 // loop_footer_branch
      %14 = sbr.rel target = $region3
    $region8: #{tpu_custom_call.1} parent=1 // loop_exit
      _
    %993 = vsyncpa [#allocation3], 1
    %s994 = scalar_lea.sflag [#allocation3], 1
    %995 = vsyncpa %s994, 1
    %996 = vsyncpa [#allocation4], 1
    %s997 = scalar_lea.sflag [#allocation4], 1
    %998 = vsyncpa %s997, 1

</llo_original>
